<compile_context>
chip_gen: v6e
topology: v6e:2x2x1
jax: 0.10.0
libtpu: 0.0.40
codegen_flags: <defaults>
</compile_context>

<pallas_src>
import functools

import jax
import jax.numpy as jnp
from jax.experimental import pallas as pl
from jax.experimental.pallas import tpu as pltpu

HIDDEN = 768
NUM_HEADS = 12
HEAD_DIM = HIDDEN // NUM_HEADS  # 64

# Flip to jnp.bfloat16 on v6e/v7x for ~2x MXU throughput (accumulation stays
# f32; expect ~1e-2 relative tolerance vs. the f32 reference).
MATMUL_DTYPE = jnp.float32


def _pick_tile(dim, target, align):
    """Largest multiple of `align` that divides `dim` and is <= `target`."""
    if dim <= target:
        return dim
    t = (target // align) * align
    while t >= align:
        if dim % t == 0:
            return t
        t -= align
    return dim


# ---------------------------------------------------------------------------
# Fused Q|K|V projection: y = x @ w_qkv + b_qkv    ([M, 768] @ [768, 2304])
# ---------------------------------------------------------------------------
def _linear_kernel(x_ref, w_ref, b_ref, o_ref):
    y = jnp.dot(x_ref[...], w_ref[...], preferred_element_type=jnp.float32)
    o_ref[...] = (y + b_ref[...]).astype(o_ref.dtype)


def fused_linear(x, w, b):
    """x: [M, K], w: [K, N], b: [N] -> [M, N] float32 (PyTorch Linear, w = weight.T)."""
    M, K = x.shape
    N = w.shape[1]
    tm = _pick_tile(M, 256, 8)
    tn = _pick_tile(N, 1024, 128)
    x = x.astype(MATMUL_DTYPE)
    w = w.astype(MATMUL_DTYPE)
    b2 = b.reshape(1, N).astype(jnp.float32)
    return pl.pallas_call(
        _linear_kernel,
        out_shape=jax.ShapeDtypeStruct((M, N), jnp.float32),
        grid=(M // tm, N // tn),
        in_specs=[
            pl.BlockSpec((tm, K), lambda i, j: (i, 0)),
            pl.BlockSpec((K, tn), lambda i, j: (0, j)),
            pl.BlockSpec((1, tn), lambda i, j: (0, j)),   # bias per N-tile
        ],
        out_specs=pl.BlockSpec((tm, tn), lambda i, j: (i, j)),
        compiler_params=pltpu.CompilerParams(
            dimension_semantics=("parallel", "parallel")),
    )(x, w, b2)


# ---------------------------------------------------------------------------
# Multi-head attention: one grid step per batch element, all heads at once.
# ---------------------------------------------------------------------------
def _mha_kernel(q_ref, k_ref, v_ref, m_ref, o_ref, *, compute_dtype):
    # q: [H, Sq, Dh]; k, v: [H, Skv, Dh]; m: [Sq, Skv]; o: [Sq, H*Dh]
    q = q_ref[...].astype(compute_dtype) * 0.125   # fold 1/sqrt(Dh)=1/8 onto Q
    k = k_ref[...].astype(compute_dtype)
    v = v_ref[...].astype(compute_dtype)

    scores = jnp.einsum("hqd,hkd->hqk", q, k,
                        preferred_element_type=jnp.float32)       # [H, Sq, Skv]
    mask = m_ref[...]                                              # [Sq, Skv]
    scores = jnp.where(mask[None, :, :] != 0.0, scores, jnp.float32(-1e10))

    scores = scores - jnp.max(scores, axis=-1, keepdims=True)
    e = jnp.exp(scores)
    probs = e / jnp.sum(e, axis=-1, keepdims=True)
    # nn.Dropout(p=0.1) on probs: identity at inference.

    ctx = jnp.einsum("hqk,hkd->hqd", probs.astype(compute_dtype), v,
                     preferred_element_type=jnp.float32)           # [H, Sq, Dh]

    # Assemble the lane-dense [Sq, H*Dh] output slab head by head at static
    # lane offsets (avoids an in-kernel minor-dim reshape; the HBM writeback
    # block is a dense [Sq, 768] slab).
    for h in range(NUM_HEADS):
        o_ref[:, h * HEAD_DIM:(h + 1) * HEAD_DIM] = ctx[h].astype(o_ref.dtype)


def attention(q, k, v, mask):
    """q: [B, H, Sq, Dh]; k, v: [B, H, Skv, Dh]; mask: [B, 1, Sq, Skv]
    -> context [B, Sq, H*Dh] with heads already merged (lane-dense)."""
    B, H, Sq, Dh = q.shape
    Skv = k.shape[2]
    kv_spec = pl.BlockSpec((None, H, Skv, Dh), lambda b: (b, 0, 0, 0))
    return pl.pallas_call(
        functools.partial(_mha_kernel, compute_dtype=MATMUL_DTYPE),
        out_shape=jax.ShapeDtypeStruct((B, Sq, H * Dh), jnp.float32),
        grid=(B,),
        in_specs=[
            pl.BlockSpec((None, H, Sq, Dh), lambda b: (b, 0, 0, 0)),
            kv_spec,
            kv_spec,
            pl.BlockSpec((None, None, Sq, Skv), lambda b: (b, 0, 0, 0)),
        ],
        out_specs=pl.BlockSpec((None, Sq, H * Dh), lambda b: (b, 0, 0)),
        compiler_params=pltpu.CompilerParams(
            dimension_semantics=("parallel",)),
    )(q, k, v, mask)


# ---------------------------------------------------------------------------
# Module forward (mirrors TransformerSelfAttention.forward)
# ---------------------------------------------------------------------------
def transformer_self_attention(hidden_states, layer_past, mask, params):
    """hidden_states: [B, S, 768]; mask: [B, 1, *, *] -> (context, present)."""
    B, S, D = hidden_states.shape

    # Fused Q|K|V projection (single tiled matmul).
    qkv = fused_linear(hidden_states.reshape(B * S, D),
                       params["qkv_w"], params["qkv_b"])          # [B*S, 2304]
    qkv = qkv.reshape(B, S, 3, NUM_HEADS, HEAD_DIM)

    # transpose_for_scores -> [B, H, S, Dh].  The K/V transposes are required
    # anyway for the torch layout of `present`; only Q's is extra (tiny).
    q = qkv[:, :, 0].transpose(0, 2, 1, 3)
    k = qkv[:, :, 1].transpose(0, 2, 1, 3)
    v = qkv[:, :, 2].transpose(0, 2, 1, 3)

    if layer_past is not None:
        # TODO(synk): KV-cache concat path implemented but not exercised below.
        past_key, past_value = layer_past[0], layer_past[1]
        k = jnp.concatenate([past_key, k], axis=-2)
        v = jnp.concatenate([past_value, v], axis=-2)

    present = jnp.stack([k, v], axis=0)            # torch.stack((k, v), dim=0)

    nd, ns = q.shape[-2], k.shape[-2]
    mask = mask[:, :, ns - nd:ns, :ns]

    context = attention(q, k, v, mask)             # [B, S, 768], heads merged
    return context, present


# ---------------------------------------------------------------------------
# Pure-JAX reference (validation) + synthetic parameters
# ---------------------------------------------------------------------------
def _reference(hidden_states, layer_past, mask, params):
    B, S, D = hidden_states.shape
    qkv = jnp.dot(hidden_states.reshape(B * S, D), params["qkv_w"],
                  precision="highest") + params["qkv_b"]
    qkv = qkv.reshape(B, S, 3, NUM_HEADS, HEAD_DIM)
    q, k, v = (qkv[:, :, i].transpose(0, 2, 1, 3) for i in range(3))
    if layer_past is not None:
        k = jnp.concatenate([layer_past[0], k], axis=-2)
        v = jnp.concatenate([layer_past[1], v], axis=-2)
    present = jnp.stack([k, v], axis=0)
    scores = jnp.einsum("bhqd,bhkd->bhqk", q, k, precision="highest") / 8.0
    nd, ns = scores.shape[-2], scores.shape[-1]
    m = mask[:, :, ns - nd:ns, :ns]
    scores = scores * m - 1e10 * (1.0 - m)
    probs = jax.nn.softmax(scores, axis=-1)
    ctx = jnp.einsum("bhqk,bhkd->bhqd", probs, v, precision="highest")
    ctx = ctx.transpose(0, 2, 1, 3).reshape(B, S, D)
    return ctx, present


def init_params(key):
    kq, kk, kv, kb = jax.random.split(key, 4)

    def w(k_):
        return jax.random.normal(k_, (HIDDEN, HIDDEN), jnp.float32) * 0.02

    qkv_w = jnp.concatenate([w(kq), w(kk), w(kv)], axis=1)        # [768, 2304]
    qkv_b = jax.random.normal(kb, (3 * HIDDEN,), jnp.float32) * 0.02
    return {"qkv_w": qkv_w, "qkv_b": qkv_b}


if __name__ == "__main__":
    B, S = 2, 8
    key = jax.random.PRNGKey(0)
    k_hidden, k_params = jax.random.split(key)

    hidden_states = jax.random.normal(k_hidden, (B, S, HIDDEN), jnp.float32)
    causal = jnp.tril(jnp.ones((S, S), jnp.float32))
    mask = jnp.broadcast_to(causal, (B, 1, S, S))
    layer_past = None
    params = init_params(k_params)

    ctx, present = transformer_self_attention(hidden_states, layer_past, mask, params)
    ctx = jax.block_until_ready(ctx)
    present = jax.block_until_ready(present)

    assert ctx.shape == (B, S, HIDDEN)
    assert present.shape == (2, B, NUM_HEADS, S, HEAD_DIM)

    ctx_ref, present_ref = _reference(hidden_states, layer_past, mask, params)
    assert jnp.allclose(ctx, ctx_ref, atol=2e-2, rtol=2e-2), (
        "context mismatch: %e" % float(jnp.max(jnp.abs(ctx - ctx_ref))))
    assert jnp.allclose(present, present_ref, atol=2e-2, rtol=2e-2), (
        "present mismatch: %e" % float(jnp.max(jnp.abs(present - present_ref))))

    print("KERNEL_OK")
</pallas_src>

<mosaic_0001>
module attributes {stable_mosaic.version = 11 : i64} {
  func.func @_linear_kernel(%arg0: i32, %arg1: i32, %arg2: memref<16x768xf32, #tpu.memory_space<vmem>>, %arg3: memref<768x768xf32, #tpu.memory_space<vmem>>, %arg4: memref<1x768xf32, #tpu.memory_space<vmem>>, %arg5: memref<16x768xf32, #tpu.memory_space<vmem>>) attributes {dimension_semantics = [#tpu.dimension_semantics<parallel>, #tpu.dimension_semantics<parallel>], iteration_bounds = array<i64: 1, 3>, scalar_prefetch = 0 : i64, scratch_operands = 0 : i64, tpu.core_type = #tpu.core_type<tc>, window_params = [{transform_indices = @transform_0, window_bounds = array<i64: 16, 768>}, {transform_indices = @transform_1, window_bounds = array<i64: 768, 768>}, {transform_indices = @transform_2, window_bounds = array<i64: 1, 768>}, {transform_indices = @transform_3, window_bounds = array<i64: 16, 768>}]} {
    %c0 = arith.constant 0 : index
    %c0_0 = arith.constant 0 : index
    %0 = vector.load %arg2[%c0, %c0_0] : memref<16x768xf32, #tpu.memory_space<vmem>>, vector<16x768xf32>
    %c0_1 = arith.constant 0 : index
    %c0_2 = arith.constant 0 : index
    %1 = vector.load %arg3[%c0_1, %c0_2] : memref<768x768xf32, #tpu.memory_space<vmem>>, vector<768x768xf32>
    %cst = arith.constant dense<0.000000e+00> : vector<16x768xf32>
    %2 = tpu.matmul %0, %1, %cst {dimension_numbers = #tpu.dot_dimension_numbers<[1], [0], [0], [1], [0, 0, 1, 1], [], []>} : vector<16x768xf32>, vector<768x768xf32>, vector<16x768xf32> -> vector<16x768xf32>
    %c0_3 = arith.constant 0 : index
    %c0_4 = arith.constant 0 : index
    %3 = vector.load %arg4[%c0_3, %c0_4] : memref<1x768xf32, #tpu.memory_space<vmem>>, vector<1x768xf32>
    %4 = vector.broadcast %3 : vector<1x768xf32> to vector<16x768xf32>
    %5 = arith.addf %2, %4 : vector<16x768xf32>
    %c0_5 = arith.constant 0 : index
    %c0_6 = arith.constant 0 : index
    %6 = vector.load %arg5[%c0_5, %c0_6] : memref<16x768xf32, #tpu.memory_space<vmem>>, vector<16x768xf32>
    tpu.vector_store %arg5[%c0_5, %c0_6], %5 {strides = array<i32>} : memref<16x768xf32, #tpu.memory_space<vmem>>, vector<16x768xf32>,
    return
  }
  func.func @transform_0(%arg0: i32, %arg1: i32) -> (i32, i32) {
    %c0_i32 = arith.constant 0 : i32
    %c0_i32_0 = arith.constant 0 : i32
    return %arg0, %c0_i32 : i32, i32
  }
  func.func @transform_1(%arg0: i32, %arg1: i32) -> (i32, i32) {
    %c0_i32 = arith.constant 0 : i32
    %c0_i32_0 = arith.constant 0 : i32
    return %c0_i32, %arg1 : i32, i32
  }
  func.func @transform_2(%arg0: i32, %arg1: i32) -> (i32, i32) {
    %c0_i32 = arith.constant 0 : i32
    %c0_i32_0 = arith.constant 0 : i32
    return %c0_i32, %arg1 : i32, i32
  }
  func.func @transform_3(%arg0: i32, %arg1: i32) -> (i32, i32) {
    %c0_i32 = arith.constant 0 : i32
    return %arg0, %arg1 : i32, i32
  }
}

</mosaic_0001>

<llo_original>
// kernel: tpu_custom_call.1
$region0: #{tpu_custom_call.1}
  #allocation0 [shape = 'u32[]', space=smem, size = 0x4, offset = 0x4, fixed_abs, tag = 'smem constant byte address 0x4 - core index']
  #allocation1 [shape = 'u32[144,128]{1,0:T(1,128)}', space=vmem, size = 0x12000, scoped, tag = 'internal scratch']
  %s0 = inlined_call_operand.hbm [shape: f32[16,768], index: 0, kind: input, shape index: {}]
  %s1 = inlined_call_operand.hbm [shape: f32[768,2304], index: 1, kind: input, shape index: {}]
  %s2 = inlined_call_operand.hbm [shape: f32[1,2304], index: 2, kind: input, shape index: {}]
  %s3 = inlined_call_operand.hbm [shape: f32[16,2304], index: 3, kind: output, shape index: {}]
  %s4 = sld [smem:[#allocation0]]
  $region57: #{tpu_custom_call.1} parent=0
    _
  %s6 = ssub.s32 1, %s4
  %s7 = scalar_select 0, %s6, %s4
  $region1: #{tpu_custom_call.1} parent=0
    #allocation2 [shape = 'u8[49152]{0}', space=vmem, size = 0xc000, scoped, tag = 'input window, operand 0, single buffered']
    #allocation3 [shape = 's32[2]{0}', space=sflag, size = 0x8, scoped, tag = 'scoped memory for tpu_custom_call.1']
    #allocation4 [shape = 's32[2]{0}', space=sflag, size = 0x8, scoped, tag = 'scoped memory for tpu_custom_call.1']
    #allocation5 [shape = 'u8[4718592]{0}', space=vmem, size = 0x480000, scoped, tag = 'input window, operand 1']
    #allocation6 [shape = 's32[2]{0}', space=sflag, size = 0x8, scoped, tag = 'scoped memory for tpu_custom_call.1']
    #allocation7 [shape = 'u8[6144]{0}', space=vmem, size = 0x1800, scoped, tag = 'input window, operand 2']
    #allocation8 [shape = 'u8[98304]{0}', space=vmem, size = 0x18000, scoped, tag = 'output window, operand 0']
    %8 = vsyncpa [#allocation3], 0
    %9 = vsyncpa [#allocation6], 0
    %s10 = scalar_lea.sflag [#allocation6], 1
    %11 = vsyncpa %s10, 0
    %12 = vsyncpa [#allocation4], 0
    %s13 = scalar_lea.sflag [#allocation4], 1
    %14 = vsyncpa %s13, 0
    loop: start=0, step=1, limit=5
    $region2: #{tpu_custom_call.1} parent=1 // loop_pre_header
      _
    $region3: #{tpu_custom_call.1} parent=1 // loop_header
      %s16 = sphi 0, %s20
      %p17 = scmp.ge.s32.totalorder %s16, 5
      %s23 = sphi 0, %s35
      %s24 = sphi 0, %s31
      %s25 = sphi 0, %s23
      %s26 = sphi 0, %s24
      %s27 = sphi 0, %s25
      %s28 = sphi 0, %s26
      %s38 = sphi 0, %s40
      %s41 = sphi 0, %s38
      %s42 = sphi 0, %s41
      %s58 = sphi 0, %s42
      %s64 = sphi 0, %s66
      %s67 = sphi 0, %s64
      %s68 = sphi 0, %s67
      %s84 = sphi 0, %s68
      %s90 = sphi 0, %s92
      %s93 = sphi 0, %s90
      %s94 = sphi 0, %s93
      %s110 = sphi 0, %s94
      %s118 = sphi 0, %s120
      %s121 = sphi 0, %s118
      %s122 = sphi 0, %s121
      %s138 = sphi 0, %s122
    $region4: #{tpu_custom_call.1} parent=1 // loop_header_branch
      %19 = sbr.rel (%p17) target = $region8
    $region5: #{tpu_custom_call.1} parent=1 // loop_body
      %s21 = ssub.s32 %s16, 1
      %s22 = ssub.s32 %s16, 2
      %s29 = sadd.s32 1, %s24
      %p30 = scmp.ge.s32.totalorder %s29, 3
      %s31 = scalar_select %p30, 0, %s29
      %s32 = sadd.s32 1, %s23
      %s33 = scalar_select %p30, %s32, %s23
      %p34 = scmp.ge.s32.totalorder %s33, 1
      %s35 = scalar_select %p34, 0, %s33
      %s36 = ssub.s32 %s23, %s35
      %p37 = scmp.eq.s32.totalorder %s36, 0
      %s39 = sadd.s32 %s38, 1
      %s40 = scalar_select %p37, %s38, %s39
      %p43 = pneg %p37
      %p44 = scmp.eq.s32.totalorder %s16, 2
      %p45 = por %p43, %p44
      %p46 = scmp.ne.s32.totalorder %s38, %s41
      %p47 = scmp.eq.s32.totalorder %s16, 0
      %p48 = por %p46, %p47
      %p49 = scmp.ne.s32.totalorder %s38, %s41
      %p50 = scmp.eq.s32.totalorder %s21, 2
      %p51 = por %p49, %p50
      %p52 = scmp.ne.s32.totalorder %s41, %s42
      %p53 = scmp.eq.s32.totalorder %s21, 0
      %p54 = por %p52, %p53
      %p55 = scmp.ne.s32.totalorder %s41, %s42
      %p56 = scmp.eq.s32.totalorder %s22, 2
      %p57 = por %p55, %p56
      %p59 = scmp.ne.s32.totalorder %s42, %s58
      %p60 = scmp.eq.s32.totalorder %s22, 0
      %p61 = por %p59, %p60
      %s62 = ssub.s32 %s24, %s31
      %p63 = scmp.eq.s32.totalorder %s62, 0
      %s65 = sadd.s32 %s64, 1
      %s66 = scalar_select %p63, %s64, %s65
      %p69 = pneg %p63
      %p70 = scmp.eq.s32.totalorder %s16, 2
      %p71 = por %p69, %p70
      %p72 = scmp.ne.s32.totalorder %s64, %s67
      %p73 = scmp.eq.s32.totalorder %s16, 0
      %p74 = por %p72, %p73
      %p75 = scmp.ne.s32.totalorder %s64, %s67
      %p76 = scmp.eq.s32.totalorder %s21, 2
      %p77 = por %p75, %p76
      %p78 = scmp.ne.s32.totalorder %s67, %s68
      %p79 = scmp.eq.s32.totalorder %s21, 0
      %p80 = por %p78, %p79
      %p81 = scmp.ne.s32.totalorder %s67, %s68
      %p82 = scmp.eq.s32.totalorder %s22, 2
      %p83 = por %p81, %p82
      %p85 = scmp.ne.s32.totalorder %s68, %s84
      %p86 = scmp.eq.s32.totalorder %s22, 0
      %p87 = por %p85, %p86
      %s88 = ssub.s32 %s24, %s31
      %p89 = scmp.eq.s32.totalorder %s88, 0
      %s91 = sadd.s32 %s90, 1
      %s92 = scalar_select %p89, %s90, %s91
      %p95 = pneg %p89
      %p96 = scmp.eq.s32.totalorder %s16, 2
      %p97 = por %p95, %p96
      %p98 = scmp.ne.s32.totalorder %s90, %s93
      %p99 = scmp.eq.s32.totalorder %s16, 0
      %p100 = por %p98, %p99
      %p101 = scmp.ne.s32.totalorder %s90, %s93
      %p102 = scmp.eq.s32.totalorder %s21, 2
      %p103 = por %p101, %p102
      %p104 = scmp.ne.s32.totalorder %s93, %s94
      %p105 = scmp.eq.s32.totalorder %s21, 0
      %p106 = por %p104, %p105
      %p107 = scmp.ne.s32.totalorder %s93, %s94
      %p108 = scmp.eq.s32.totalorder %s22, 2
      %p109 = por %p107, %p108
      %p111 = scmp.ne.s32.totalorder %s94, %s110
      %p112 = scmp.eq.s32.totalorder %s22, 0
      %p113 = por %p111, %p112
      %s114 = ssub.s32 %s23, %s35
      %s115 = ssub.s32 %s24, %s31
      %s116 = sor.u32 %s114, %s115
      %p117 = scmp.eq.s32.totalorder %s116, 0
      %s119 = sadd.s32 %s118, 1
      %s120 = scalar_select %p117, %s118, %s119
      %p123 = pneg %p117
      %p124 = scmp.eq.s32.totalorder %s16, 2
      %p125 = por %p123, %p124
      %p126 = scmp.ne.s32.totalorder %s118, %s121
      %p127 = scmp.eq.s32.totalorder %s16, 0
      %p128 = por %p126, %p127
      %p129 = scmp.ne.s32.totalorder %s118, %s121
      %p130 = scmp.eq.s32.totalorder %s21, 2
      %p131 = por %p129, %p130
      %p132 = scmp.ne.s32.totalorder %s121, %s122
      %p133 = scmp.eq.s32.totalorder %s21, 0
      %p134 = por %p132, %p133
      %p135 = scmp.ne.s32.totalorder %s121, %s122
      %p136 = scmp.eq.s32.totalorder %s22, 2
      %p137 = por %p135, %p136
      %p139 = scmp.ne.s32.totalorder %s122, %s138
      %p140 = scmp.eq.s32.totalorder %s22, 0
      %p141 = por %p139, %p140
      %p142 = scmp.le.s32.totalorder 1, %s16
      %p143 = scmp.lt.s32.totalorder %s16, 4
      %p144 = pnand %p142, %p143
      %p145 = pneg %p144
      // Predicated region
      $region9: #{tpu_custom_call.1} parent=5 // pred_check
        _
      $region10: #{tpu_custom_call.1} parent=5 // pred_check_branch
        %147 = sbr.rel (%p144) target = $region12
      $region11: #{tpu_custom_call.1} parent=5 // pred_region
        %s148 = ssub.s32 %s16, 1
        // Predicated region
        $region13: #{tpu_custom_call.1} parent=11 // pred_check
          %p149 = pneg %p54
        $region14: #{tpu_custom_call.1} parent=11 // pred_check_branch
          %151 = sbr.rel (%p149) target = $region16
        $region15: #{tpu_custom_call.1} parent=11 // pred_region
          %s152 = smul.u32 2, %s25
          %s154 = ssub.s32 1536, 1536
          %155 = vsyncadd [#allocation3], %s154
          %s156 = smul.addr %s152, 6
          %s157 = smul.addr %s156, 128
          %s158 = scalar_lea.hbm %s0, %s157
          %s159 = sshll.u32 [#allocation2], 4
          %s160 = int_to_ptr.vmem [resolvable:$true] %s159
          %165 = dma.hbm_to_vmem [thread:$0]  %s158, 1536, %s160, [#allocation3], 768, 768, 48
        $region16: #{tpu_custom_call.1} parent=11 // pred_fallthru
          _
      $region12: #{tpu_custom_call.1} parent=5 // pred_fallthru
        _
      %p166 = scmp.lt.s32.totalorder %s16, 3
      // Predicated region
      $region17: #{tpu_custom_call.1} parent=5 // pred_check
        %p167 = pneg %p166
      $region18: #{tpu_custom_call.1} parent=5 // pred_check_branch
        %169 = sbr.rel (%p167) target = $region20
      $region19: #{tpu_custom_call.1} parent=5 // pred_region
        // Predicated region
        $region21: #{tpu_custom_call.1} parent=19 // pred_check
          %p170 = pneg %p74
        $region22: #{tpu_custom_call.1} parent=19 // pred_check_branch
          %172 = sbr.rel (%p170) target = $region24
        $region23: #{tpu_custom_call.1} parent=19 // pred_region
          %s173 = sand.u32 %s16, 1
          %s174 = scalar_lea.sflag [#allocation6], %s173
          %s175 = sand.u32 %s64, 1
          %s176 = smul.addr %s175, 4608
          %s177 = scalar_lea.vmem [#allocation5], %s176
          %s178 = smul.u32 6, %s24
          %s180 = ssub.s32 73728, 73728
          %181 = vsyncadd %s174, %s180
          %s182 = smul.addr %s178, 128
          %s183 = scalar_lea.hbm %s1, %s182
          %s184 = sshll.u32 %s177, 4
          %s185 = int_to_ptr.vmem [resolvable:$true] %s184
          %190 = dma.hbm_to_vmem [thread:$0]  %s183, 73728, %s185, %s174, 2304, 768, 48
        $region24: #{tpu_custom_call.1} parent=19 // pred_fallthru
          _
        // Predicated region
        $region25: #{tpu_custom_call.1} parent=19 // pred_check
          %p191 = pneg %p100
        $region26: #{tpu_custom_call.1} parent=19 // pred_check_branch
          %193 = sbr.rel (%p191) target = $region28
        $region27: #{tpu_custom_call.1} parent=19 // pred_region
          %s194 = sand.u32 %s16, 1
          %s195 = scalar_lea.sflag [#allocation6], %s194
          %s196 = sand.u32 %s90, 1
          %s197 = smul.addr %s196, 6
          %s198 = scalar_lea.vmem [#allocation7], %s197
          %s199 = smul.u32 6, %s24
          %s201 = ssub.s32 96, 96
          %202 = vsyncadd %s195, %s201
          %s203 = smul.addr %s199, 16
          %s204 = scalar_lea.hbm %s2, %s203
          %s206 = sshll.u32 %s198, 4
          %s207 = int_to_ptr.vmem [resolvable:$true] %s206
          %209 = dma.hbm_to_vmem [thread:$0]  %s204, 96, %s207, %s195
        $region28: #{tpu_custom_call.1} parent=19 // pred_fallthru
          _
      $region20: #{tpu_custom_call.1} parent=5 // pred_fallthru
        _
      %p210 = scmp.le.s32.totalorder 1, %s16
      %p211 = scmp.lt.s32.totalorder %s16, 4
      %p212 = pnand %p210, %p211
      %p213 = pneg %p212
      // Predicated region
      $region29: #{tpu_custom_call.1} parent=5 // pred_check
        _
      $region30: #{tpu_custom_call.1} parent=5 // pred_check_branch
        %215 = sbr.rel (%p212) target = $region32
      $region31: #{tpu_custom_call.1} parent=5 // pred_region
        %s216 = ssub.s32 %s16, 1
        // Predicated region
        $region33: #{tpu_custom_call.1} parent=31 // pred_check
          %p217 = pneg %p54
        $region34: #{tpu_custom_call.1} parent=31 // pred_check_branch
          %219 = sbr.rel (%p217) target = $region36
        $region35: #{tpu_custom_call.1} parent=31 // pred_region
          %220 = dma.done [#allocation3], 1536
        $region36: #{tpu_custom_call.1} parent=31 // pred_fallthru
          _
        %s221 = sand.u32 %s21, 1
        %s222 = scalar_lea.sflag [#allocation6], %s221
        %s223 = sand.u32 %s67, 1
        %s224 = smul.addr %s223, 4608
        %s225 = scalar_lea.vmem [#allocation5], %s224
        // Predicated region
        $region37: #{tpu_custom_call.1} parent=31 // pred_check
          %p226 = pneg %p80
        $region38: #{tpu_custom_call.1} parent=31 // pred_check_branch
          %228 = sbr.rel (%p226) target = $region40
        $region39: #{tpu_custom_call.1} parent=31 // pred_region
          %229 = dma.done %s222, 73728
        $region40: #{tpu_custom_call.1} parent=31 // pred_fallthru
          _
        %s230 = sand.u32 %s21, 1
        %s231 = scalar_lea.sflag [#allocation6], %s230
        %s232 = sand.u32 %s93, 1
        %s233 = smul.addr %s232, 6
        %s234 = scalar_lea.vmem [#allocation7], %s233
        // Predicated region
        $region41: #{tpu_custom_call.1} parent=31 // pred_check
          %p235 = pneg %p106
        $region42: #{tpu_custom_call.1} parent=31 // pred_check_branch
          %237 = sbr.rel (%p235) target = $region44
        $region43: #{tpu_custom_call.1} parent=31 // pred_region
          %238 = dma.done %s231, 96
        $region44: #{tpu_custom_call.1} parent=31 // pred_fallthru
          _
        %p239 = pneg %p54
        %p240 = pneg %p51
        %s241 = sand.u32 %s21, 1
        %s242 = scalar_lea.sflag [#allocation6], %s241
        %s243 = sand.u32 %s67, 1
        %s244 = smul.addr %s243, 4608
        %s245 = scalar_lea.vmem [#allocation5], %s244
        %p246 = pneg %p80
        %p247 = pneg %p77
        %s248 = sand.u32 %s21, 1
        %s249 = scalar_lea.sflag [#allocation6], %s248
        %s250 = sand.u32 %s93, 1
        %s251 = smul.addr %s250, 6
        %s252 = scalar_lea.vmem [#allocation7], %s251
        %p253 = pneg %p106
        %p254 = pneg %p103
        %p255 = pneg %p134
        %p256 = pneg %p131
        %s257 = sand.u32 %s121, 1
        %s258 = scalar_lea.sflag [#allocation4], %s257
        %s259 = sand.u32 %s121, 1
        %s260 = smul.addr %s259, 96
        %s261 = scalar_lea.vmem [#allocation8], %s260
        %s262 = smul.u32 2, %s25
        %s263 = smul.u32 6, %s26
        %s264 = smul.u32 6, %s26
        %s265 = smul.u32 2, %s25
        %s266 = smul.u32 6, %s26
        %v267 = vld [vmem:[#allocation2] sm:$0xff]
        %v268 = vld [vmem:[#allocation2 + $0x8] sm:$0xff]
        %v269 = vld [vmem:[#allocation2 + $0x10] sm:$0xff]
        %v270 = vld [vmem:[#allocation2 + $0x18] sm:$0xff]
        %v271 = vld [vmem:[#allocation2 + $0x20] sm:$0xff]
        %v272 = vld [vmem:[#allocation2 + $0x28] sm:$0xff]
        %v273 = vld [vmem:[#allocation2 + $0x30] sm:$0xff]
        %v274 = vld [vmem:[#allocation2 + $0x38] sm:$0xff]
        %v275 = vld [vmem:[#allocation2 + $0x40] sm:$0xff]
        %v276 = vld [vmem:[#allocation2 + $0x48] sm:$0xff]
        %v277 = vld [vmem:[#allocation2 + $0x50] sm:$0xff]
        %v278 = vld [vmem:[#allocation2 + $0x58] sm:$0xff]
        %v279 = vld [vmem:[%s225] sm:$0xff]
        %v280 = vld [vmem:[%s225 + $0x8] sm:$0xff]
        %v281 = vld [vmem:[%s225 + $0x10] sm:$0xff]
        %v282 = vld [vmem:[%s225 + $0x18] sm:$0xff]
        %v283 = vld [vmem:[%s225 + $0x20] sm:$0xff]
        %v284 = vld [vmem:[%s225 + $0x28] sm:$0xff]
        %v285 = vld [vmem:[%s225 + $0x30] sm:$0xff]
        %v286 = vld [vmem:[%s225 + $0x38] sm:$0xff]
        %v287 = vld [vmem:[%s225 + $0x40] sm:$0xff]
        %v288 = vld [vmem:[%s225 + $0x48] sm:$0xff]
        %v289 = vld [vmem:[%s225 + $0x50] sm:$0xff]
        %v290 = vld [vmem:[%s225 + $0x58] sm:$0xff]
        %v291 = vld [vmem:[%s225 + $0x60] sm:$0xff]
        %v292 = vld [vmem:[%s225 + $0x68] sm:$0xff]
        %v293 = vld [vmem:[%s225 + $0x70] sm:$0xff]
        %v294 = vld [vmem:[%s225 + $0x78] sm:$0xff]
        %v295 = vld [vmem:[%s225 + $0x80] sm:$0xff]
        %v296 = vld [vmem:[%s225 + $0x88] sm:$0xff]
        %v297 = vld [vmem:[%s225 + $0x90] sm:$0xff]
        %v298 = vld [vmem:[%s225 + $0x98] sm:$0xff]
        %v299 = vld [vmem:[%s225 + $0xa0] sm:$0xff]
        %v300 = vld [vmem:[%s225 + $0xa8] sm:$0xff]
        %v301 = vld [vmem:[%s225 + $0xb0] sm:$0xff]
        %v302 = vld [vmem:[%s225 + $0xb8] sm:$0xff]
        %v303 = vld [vmem:[%s225 + $0xc0] sm:$0xff]
        %v304 = vld [vmem:[%s225 + $0xc8] sm:$0xff]
        %v305 = vld [vmem:[%s225 + $0xd0] sm:$0xff]
        %v306 = vld [vmem:[%s225 + $0xd8] sm:$0xff]
        %v307 = vld [vmem:[%s225 + $0xe0] sm:$0xff]
        %v308 = vld [vmem:[%s225 + $0xe8] sm:$0xff]
        %v309 = vld [vmem:[%s225 + $0xf0] sm:$0xff]
        %v310 = vld [vmem:[%s225 + $0xf8] sm:$0xff]
        %v311 = vld [vmem:[%s225 + $0x100] sm:$0xff]
        %v312 = vld [vmem:[%s225 + $0x108] sm:$0xff]
        %v313 = vld [vmem:[%s225 + $0x110] sm:$0xff]
        %v314 = vld [vmem:[%s225 + $0x118] sm:$0xff]
        %v315 = vld [vmem:[%s225 + $0x120] sm:$0xff]
        %v316 = vld [vmem:[%s225 + $0x128] sm:$0xff]
        %v317 = vld [vmem:[%s225 + $0x130] sm:$0xff]
        %v318 = vld [vmem:[%s225 + $0x138] sm:$0xff]
        %v319 = vld [vmem:[%s225 + $0x140] sm:$0xff]
        %v320 = vld [vmem:[%s225 + $0x148] sm:$0xff]
        %v321 = vld [vmem:[%s225 + $0x150] sm:$0xff]
        %v322 = vld [vmem:[%s225 + $0x158] sm:$0xff]
        %v323 = vld [vmem:[%s225 + $0x160] sm:$0xff]
        %v324 = vld [vmem:[%s225 + $0x168] sm:$0xff]
        %v325 = vld [vmem:[%s225 + $0x170] sm:$0xff]
        %v326 = vld [vmem:[%s225 + $0x178] sm:$0xff]
        %v327 = vld [vmem:[%s225 + $0x180] sm:$0xff]
        %v328 = vld [vmem:[%s225 + $0x188] sm:$0xff]
        %v329 = vld [vmem:[%s225 + $0x190] sm:$0xff]
        %v330 = vld [vmem:[%s225 + $0x198] sm:$0xff]
        %v331 = vld [vmem:[%s225 + $0x1a0] sm:$0xff]
        %v332 = vld [vmem:[%s225 + $0x1a8] sm:$0xff]
        %v333 = vld [vmem:[%s225 + $0x1b0] sm:$0xff]
        %v334 = vld [vmem:[%s225 + $0x1b8] sm:$0xff]
        %v335 = vld [vmem:[%s225 + $0x1c0] sm:$0xff]
        %v336 = vld [vmem:[%s225 + $0x1c8] sm:$0xff]
        %v337 = vld [vmem:[%s225 + $0x1d0] sm:$0xff]
        %v338 = vld [vmem:[%s225 + $0x1d8] sm:$0xff]
        %v339 = vld [vmem:[%s225 + $0x1e0] sm:$0xff]
        %v340 = vld [vmem:[%s225 + $0x1e8] sm:$0xff]
        %v341 = vld [vmem:[%s225 + $0x1f0] sm:$0xff]
        %v342 = vld [vmem:[%s225 + $0x1f8] sm:$0xff]
        %v343 = vld [vmem:[%s225 + $0x200] sm:$0xff]
        %v344 = vld [vmem:[%s225 + $0x208] sm:$0xff]
        %v345 = vld [vmem:[%s225 + $0x210] sm:$0xff]
        %v346 = vld [vmem:[%s225 + $0x218] sm:$0xff]
        %v347 = vld [vmem:[%s225 + $0x220] sm:$0xff]
        %v348 = vld [vmem:[%s225 + $0x228] sm:$0xff]
        %v349 = vld [vmem:[%s225 + $0x230] sm:$0xff]
        %v350 = vld [vmem:[%s225 + $0x238] sm:$0xff]
        %v351 = vld [vmem:[%s225 + $0x240] sm:$0xff]
        %v352 = vld [vmem:[%s225 + $0x248] sm:$0xff]
        %v353 = vld [vmem:[%s225 + $0x250] sm:$0xff]
        %v354 = vld [vmem:[%s225 + $0x258] sm:$0xff]
        %v355 = vld [vmem:[%s225 + $0x260] sm:$0xff]
        %v356 = vld [vmem:[%s225 + $0x268] sm:$0xff]
        %v357 = vld [vmem:[%s225 + $0x270] sm:$0xff]
        %v358 = vld [vmem:[%s225 + $0x278] sm:$0xff]
        %v359 = vld [vmem:[%s225 + $0x280] sm:$0xff]
        %v360 = vld [vmem:[%s225 + $0x288] sm:$0xff]
        %v361 = vld [vmem:[%s225 + $0x290] sm:$0xff]
        %v362 = vld [vmem:[%s225 + $0x298] sm:$0xff]
        %v363 = vld [vmem:[%s225 + $0x2a0] sm:$0xff]
        %v364 = vld [vmem:[%s225 + $0x2a8] sm:$0xff]
        %v365 = vld [vmem:[%s225 + $0x2b0] sm:$0xff]
        %v366 = vld [vmem:[%s225 + $0x2b8] sm:$0xff]
        %v367 = vld [vmem:[%s225 + $0x2c0] sm:$0xff]
        %v368 = vld [vmem:[%s225 + $0x2c8] sm:$0xff]
        %v369 = vld [vmem:[%s225 + $0x2d0] sm:$0xff]
        %v370 = vld [vmem:[%s225 + $0x2d8] sm:$0xff]
        %v371 = vld [vmem:[%s225 + $0x2e0] sm:$0xff]
        %v372 = vld [vmem:[%s225 + $0x2e8] sm:$0xff]
        %v373 = vld [vmem:[%s225 + $0x2f0] sm:$0xff]
        %v374 = vld [vmem:[%s225 + $0x2f8] sm:$0xff]
        %v375 = vld [vmem:[%s225 + $0x300] sm:$0xff]
        %v376 = vld [vmem:[%s225 + $0x308] sm:$0xff]
        %v377 = vld [vmem:[%s225 + $0x310] sm:$0xff]
        %v378 = vld [vmem:[%s225 + $0x318] sm:$0xff]
        %v379 = vld [vmem:[%s225 + $0x320] sm:$0xff]
        %v380 = vld [vmem:[%s225 + $0x328] sm:$0xff]
        %v381 = vld [vmem:[%s225 + $0x330] sm:$0xff]
        %v382 = vld [vmem:[%s225 + $0x338] sm:$0xff]
        %v383 = vld [vmem:[%s225 + $0x340] sm:$0xff]
        %v384 = vld [vmem:[%s225 + $0x348] sm:$0xff]
        %v385 = vld [vmem:[%s225 + $0x350] sm:$0xff]
        %v386 = vld [vmem:[%s225 + $0x358] sm:$0xff]
        %v387 = vld [vmem:[%s225 + $0x360] sm:$0xff]
        %v388 = vld [vmem:[%s225 + $0x368] sm:$0xff]
        %v389 = vld [vmem:[%s225 + $0x370] sm:$0xff]
        %v390 = vld [vmem:[%s225 + $0x378] sm:$0xff]
        %v391 = vld [vmem:[%s225 + $0x380] sm:$0xff]
        %v392 = vld [vmem:[%s225 + $0x388] sm:$0xff]
        %v393 = vld [vmem:[%s225 + $0x390] sm:$0xff]
        %v394 = vld [vmem:[%s225 + $0x398] sm:$0xff]
        %v395 = vld [vmem:[%s225 + $0x3a0] sm:$0xff]
        %v396 = vld [vmem:[%s225 + $0x3a8] sm:$0xff]
        %v397 = vld [vmem:[%s225 + $0x3b0] sm:$0xff]
        %v398 = vld [vmem:[%s225 + $0x3b8] sm:$0xff]
        %v399 = vld [vmem:[%s225 + $0x3c0] sm:$0xff]
        %v400 = vld [vmem:[%s225 + $0x3c8] sm:$0xff]
        %v401 = vld [vmem:[%s225 + $0x3d0] sm:$0xff]
        %v402 = vld [vmem:[%s225 + $0x3d8] sm:$0xff]
        %v403 = vld [vmem:[%s225 + $0x3e0] sm:$0xff]
        %v404 = vld [vmem:[%s225 + $0x3e8] sm:$0xff]
        %v405 = vld [vmem:[%s225 + $0x3f0] sm:$0xff]
        %v406 = vld [vmem:[%s225 + $0x3f8] sm:$0xff]
        %v407 = vld [vmem:[%s225 + $0x400] sm:$0xff]
        %v408 = vld [vmem:[%s225 + $0x408] sm:$0xff]
        %v409 = vld [vmem:[%s225 + $0x410] sm:$0xff]
        %v410 = vld [vmem:[%s225 + $0x418] sm:$0xff]
        %v411 = vld [vmem:[%s225 + $0x420] sm:$0xff]
        %v412 = vld [vmem:[%s225 + $0x428] sm:$0xff]
        %v413 = vld [vmem:[%s225 + $0x430] sm:$0xff]
        %v414 = vld [vmem:[%s225 + $0x438] sm:$0xff]
        %v415 = vld [vmem:[%s225 + $0x440] sm:$0xff]
        %v416 = vld [vmem:[%s225 + $0x448] sm:$0xff]
        %v417 = vld [vmem:[%s225 + $0x450] sm:$0xff]
        %v418 = vld [vmem:[%s225 + $0x458] sm:$0xff]
        %v419 = vld [vmem:[%s225 + $0x460] sm:$0xff]
        %v420 = vld [vmem:[%s225 + $0x468] sm:$0xff]
        %v421 = vld [vmem:[%s225 + $0x470] sm:$0xff]
        %v422 = vld [vmem:[%s225 + $0x478] sm:$0xff]
        %v423 = vld [vmem:[%s225 + $0x480] sm:$0xff]
        %v424 = vld [vmem:[%s225 + $0x488] sm:$0xff]
        %v425 = vld [vmem:[%s225 + $0x490] sm:$0xff]
        %v426 = vld [vmem:[%s225 + $0x498] sm:$0xff]
        %v427 = vld [vmem:[%s225 + $0x4a0] sm:$0xff]
        %v428 = vld [vmem:[%s225 + $0x4a8] sm:$0xff]
        %v429 = vld [vmem:[%s225 + $0x4b0] sm:$0xff]
        %v430 = vld [vmem:[%s225 + $0x4b8] sm:$0xff]
        %v431 = vld [vmem:[%s225 + $0x4c0] sm:$0xff]
        %v432 = vld [vmem:[%s225 + $0x4c8] sm:$0xff]
        %v433 = vld [vmem:[%s225 + $0x4d0] sm:$0xff]
        %v434 = vld [vmem:[%s225 + $0x4d8] sm:$0xff]
        %v435 = vld [vmem:[%s225 + $0x4e0] sm:$0xff]
        %v436 = vld [vmem:[%s225 + $0x4e8] sm:$0xff]
        %v437 = vld [vmem:[%s225 + $0x4f0] sm:$0xff]
        %v438 = vld [vmem:[%s225 + $0x4f8] sm:$0xff]
        %v439 = vld [vmem:[%s225 + $0x500] sm:$0xff]
        %v440 = vld [vmem:[%s225 + $0x508] sm:$0xff]
        %v441 = vld [vmem:[%s225 + $0x510] sm:$0xff]
        %v442 = vld [vmem:[%s225 + $0x518] sm:$0xff]
        %v443 = vld [vmem:[%s225 + $0x520] sm:$0xff]
        %v444 = vld [vmem:[%s225 + $0x528] sm:$0xff]
        %v445 = vld [vmem:[%s225 + $0x530] sm:$0xff]
        %v446 = vld [vmem:[%s225 + $0x538] sm:$0xff]
        %v447 = vld [vmem:[%s225 + $0x540] sm:$0xff]
        %v448 = vld [vmem:[%s225 + $0x548] sm:$0xff]
        %v449 = vld [vmem:[%s225 + $0x550] sm:$0xff]
        %v450 = vld [vmem:[%s225 + $0x558] sm:$0xff]
        %v451 = vld [vmem:[%s225 + $0x560] sm:$0xff]
        %v452 = vld [vmem:[%s225 + $0x568] sm:$0xff]
        %v453 = vld [vmem:[%s225 + $0x570] sm:$0xff]
        %v454 = vld [vmem:[%s225 + $0x578] sm:$0xff]
        %v455 = vld [vmem:[%s225 + $0x580] sm:$0xff]
        %v456 = vld [vmem:[%s225 + $0x588] sm:$0xff]
        %v457 = vld [vmem:[%s225 + $0x590] sm:$0xff]
        %v458 = vld [vmem:[%s225 + $0x598] sm:$0xff]
        %v459 = vld [vmem:[%s225 + $0x5a0] sm:$0xff]
        %v460 = vld [vmem:[%s225 + $0x5a8] sm:$0xff]
        %v461 = vld [vmem:[%s225 + $0x5b0] sm:$0xff]
        %v462 = vld [vmem:[%s225 + $0x5b8] sm:$0xff]
        %v463 = vld [vmem:[%s225 + $0x5c0] sm:$0xff]
        %v464 = vld [vmem:[%s225 + $0x5c8] sm:$0xff]
        %v465 = vld [vmem:[%s225 + $0x5d0] sm:$0xff]
        %v466 = vld [vmem:[%s225 + $0x5d8] sm:$0xff]
        %v467 = vld [vmem:[%s225 + $0x5e0] sm:$0xff]
        %v468 = vld [vmem:[%s225 + $0x5e8] sm:$0xff]
        %v469 = vld [vmem:[%s225 + $0x5f0] sm:$0xff]
        %v470 = vld [vmem:[%s225 + $0x5f8] sm:$0xff]
        %v471 = vld [vmem:[%s225 + $0x600] sm:$0xff]
        %v472 = vld [vmem:[%s225 + $0x608] sm:$0xff]
        %v473 = vld [vmem:[%s225 + $0x610] sm:$0xff]
        %v474 = vld [vmem:[%s225 + $0x618] sm:$0xff]
        %v475 = vld [vmem:[%s225 + $0x620] sm:$0xff]
        %v476 = vld [vmem:[%s225 + $0x628] sm:$0xff]
        %v477 = vld [vmem:[%s225 + $0x630] sm:$0xff]
        %v478 = vld [vmem:[%s225 + $0x638] sm:$0xff]
        %v479 = vld [vmem:[%s225 + $0x640] sm:$0xff]
        %v480 = vld [vmem:[%s225 + $0x648] sm:$0xff]
        %v481 = vld [vmem:[%s225 + $0x650] sm:$0xff]
        %v482 = vld [vmem:[%s225 + $0x658] sm:$0xff]
        %v483 = vld [vmem:[%s225 + $0x660] sm:$0xff]
        %v484 = vld [vmem:[%s225 + $0x668] sm:$0xff]
        %v485 = vld [vmem:[%s225 + $0x670] sm:$0xff]
        %v486 = vld [vmem:[%s225 + $0x678] sm:$0xff]
        %v487 = vld [vmem:[%s225 + $0x680] sm:$0xff]
        %v488 = vld [vmem:[%s225 + $0x688] sm:$0xff]
        %v489 = vld [vmem:[%s225 + $0x690] sm:$0xff]
        %v490 = vld [vmem:[%s225 + $0x698] sm:$0xff]
        %v491 = vld [vmem:[%s225 + $0x6a0] sm:$0xff]
        %v492 = vld [vmem:[%s225 + $0x6a8] sm:$0xff]
        %v493 = vld [vmem:[%s225 + $0x6b0] sm:$0xff]
        %v494 = vld [vmem:[%s225 + $0x6b8] sm:$0xff]
        %v495 = vld [vmem:[%s225 + $0x6c0] sm:$0xff]
        %v496 = vld [vmem:[%s225 + $0x6c8] sm:$0xff]
        %v497 = vld [vmem:[%s225 + $0x6d0] sm:$0xff]
        %v498 = vld [vmem:[%s225 + $0x6d8] sm:$0xff]
        %v499 = vld [vmem:[%s225 + $0x6e0] sm:$0xff]
        %v500 = vld [vmem:[%s225 + $0x6e8] sm:$0xff]
        %v501 = vld [vmem:[%s225 + $0x6f0] sm:$0xff]
        %v502 = vld [vmem:[%s225 + $0x6f8] sm:$0xff]
        %v503 = vld [vmem:[%s225 + $0x700] sm:$0xff]
        %v504 = vld [vmem:[%s225 + $0x708] sm:$0xff]
        %v505 = vld [vmem:[%s225 + $0x710] sm:$0xff]
        %v506 = vld [vmem:[%s225 + $0x718] sm:$0xff]
        %v507 = vld [vmem:[%s225 + $0x720] sm:$0xff]
        %v508 = vld [vmem:[%s225 + $0x728] sm:$0xff]
        %v509 = vld [vmem:[%s225 + $0x730] sm:$0xff]
        %v510 = vld [vmem:[%s225 + $0x738] sm:$0xff]
        %v511 = vld [vmem:[%s225 + $0x740] sm:$0xff]
        %v512 = vld [vmem:[%s225 + $0x748] sm:$0xff]
        %v513 = vld [vmem:[%s225 + $0x750] sm:$0xff]
        %v514 = vld [vmem:[%s225 + $0x758] sm:$0xff]
        %v515 = vld [vmem:[%s225 + $0x760] sm:$0xff]
        %v516 = vld [vmem:[%s225 + $0x768] sm:$0xff]
        %v517 = vld [vmem:[%s225 + $0x770] sm:$0xff]
        %v518 = vld [vmem:[%s225 + $0x778] sm:$0xff]
        %v519 = vld [vmem:[%s225 + $0x780] sm:$0xff]
        %v520 = vld [vmem:[%s225 + $0x788] sm:$0xff]
        %v521 = vld [vmem:[%s225 + $0x790] sm:$0xff]
        %v522 = vld [vmem:[%s225 + $0x798] sm:$0xff]
        %v523 = vld [vmem:[%s225 + $0x7a0] sm:$0xff]
        %v524 = vld [vmem:[%s225 + $0x7a8] sm:$0xff]
        %v525 = vld [vmem:[%s225 + $0x7b0] sm:$0xff]
        %v526 = vld [vmem:[%s225 + $0x7b8] sm:$0xff]
        %v527 = vld [vmem:[%s225 + $0x7c0] sm:$0xff]
        %v528 = vld [vmem:[%s225 + $0x7c8] sm:$0xff]
        %v529 = vld [vmem:[%s225 + $0x7d0] sm:$0xff]
        %v530 = vld [vmem:[%s225 + $0x7d8] sm:$0xff]
        %v531 = vld [vmem:[%s225 + $0x7e0] sm:$0xff]
        %v532 = vld [vmem:[%s225 + $0x7e8] sm:$0xff]
        %v533 = vld [vmem:[%s225 + $0x7f0] sm:$0xff]
        %v534 = vld [vmem:[%s225 + $0x7f8] sm:$0xff]
        %v535 = vld [vmem:[%s225 + $0x800] sm:$0xff]
        %v536 = vld [vmem:[%s225 + $0x808] sm:$0xff]
        %v537 = vld [vmem:[%s225 + $0x810] sm:$0xff]
        %v538 = vld [vmem:[%s225 + $0x818] sm:$0xff]
        %v539 = vld [vmem:[%s225 + $0x820] sm:$0xff]
        %v540 = vld [vmem:[%s225 + $0x828] sm:$0xff]
        %v541 = vld [vmem:[%s225 + $0x830] sm:$0xff]
        %v542 = vld [vmem:[%s225 + $0x838] sm:$0xff]
        %v543 = vld [vmem:[%s225 + $0x840] sm:$0xff]
        %v544 = vld [vmem:[%s225 + $0x848] sm:$0xff]
        %v545 = vld [vmem:[%s225 + $0x850] sm:$0xff]
        %v546 = vld [vmem:[%s225 + $0x858] sm:$0xff]
        %v547 = vld [vmem:[%s225 + $0x860] sm:$0xff]
        %v548 = vld [vmem:[%s225 + $0x868] sm:$0xff]
        %v549 = vld [vmem:[%s225 + $0x870] sm:$0xff]
        %v550 = vld [vmem:[%s225 + $0x878] sm:$0xff]
        %v551 = vld [vmem:[%s225 + $0x880] sm:$0xff]
        %v552 = vld [vmem:[%s225 + $0x888] sm:$0xff]
        %v553 = vld [vmem:[%s225 + $0x890] sm:$0xff]
        %v554 = vld [vmem:[%s225 + $0x898] sm:$0xff]
        %v555 = vld [vmem:[%s225 + $0x8a0] sm:$0xff]
        %v556 = vld [vmem:[%s225 + $0x8a8] sm:$0xff]
        %v557 = vld [vmem:[%s225 + $0x8b0] sm:$0xff]
        %v558 = vld [vmem:[%s225 + $0x8b8] sm:$0xff]
        %v559 = vld [vmem:[%s225 + $0x8c0] sm:$0xff]
        %v560 = vld [vmem:[%s225 + $0x8c8] sm:$0xff]
        %v561 = vld [vmem:[%s225 + $0x8d0] sm:$0xff]
        %v562 = vld [vmem:[%s225 + $0x8d8] sm:$0xff]
        %v563 = vld [vmem:[%s225 + $0x8e0] sm:$0xff]
        %v564 = vld [vmem:[%s225 + $0x8e8] sm:$0xff]
        %v565 = vld [vmem:[%s225 + $0x8f0] sm:$0xff]
        %v566 = vld [vmem:[%s225 + $0x8f8] sm:$0xff]
        %v567 = vld [vmem:[%s225 + $0x900] sm:$0xff]
        %v568 = vld [vmem:[%s225 + $0x908] sm:$0xff]
        %v569 = vld [vmem:[%s225 + $0x910] sm:$0xff]
        %v570 = vld [vmem:[%s225 + $0x918] sm:$0xff]
        %v571 = vld [vmem:[%s225 + $0x920] sm:$0xff]
        %v572 = vld [vmem:[%s225 + $0x928] sm:$0xff]
        %v573 = vld [vmem:[%s225 + $0x930] sm:$0xff]
        %v574 = vld [vmem:[%s225 + $0x938] sm:$0xff]
        %v575 = vld [vmem:[%s225 + $0x940] sm:$0xff]
        %v576 = vld [vmem:[%s225 + $0x948] sm:$0xff]
        %v577 = vld [vmem:[%s225 + $0x950] sm:$0xff]
        %v578 = vld [vmem:[%s225 + $0x958] sm:$0xff]
        %v579 = vld [vmem:[%s225 + $0x960] sm:$0xff]
        %v580 = vld [vmem:[%s225 + $0x968] sm:$0xff]
        %v581 = vld [vmem:[%s225 + $0x970] sm:$0xff]
        %v582 = vld [vmem:[%s225 + $0x978] sm:$0xff]
        %v583 = vld [vmem:[%s225 + $0x980] sm:$0xff]
        %v584 = vld [vmem:[%s225 + $0x988] sm:$0xff]
        %v585 = vld [vmem:[%s225 + $0x990] sm:$0xff]
        %v586 = vld [vmem:[%s225 + $0x998] sm:$0xff]
        %v587 = vld [vmem:[%s225 + $0x9a0] sm:$0xff]
        %v588 = vld [vmem:[%s225 + $0x9a8] sm:$0xff]
        %v589 = vld [vmem:[%s225 + $0x9b0] sm:$0xff]
        %v590 = vld [vmem:[%s225 + $0x9b8] sm:$0xff]
        %v591 = vld [vmem:[%s225 + $0x9c0] sm:$0xff]
        %v592 = vld [vmem:[%s225 + $0x9c8] sm:$0xff]
        %v593 = vld [vmem:[%s225 + $0x9d0] sm:$0xff]
        %v594 = vld [vmem:[%s225 + $0x9d8] sm:$0xff]
        %v595 = vld [vmem:[%s225 + $0x9e0] sm:$0xff]
        %v596 = vld [vmem:[%s225 + $0x9e8] sm:$0xff]
        %v597 = vld [vmem:[%s225 + $0x9f0] sm:$0xff]
        %v598 = vld [vmem:[%s225 + $0x9f8] sm:$0xff]
        %v599 = vld [vmem:[%s225 + $0xa00] sm:$0xff]
        %v600 = vld [vmem:[%s225 + $0xa08] sm:$0xff]
        %v601 = vld [vmem:[%s225 + $0xa10] sm:$0xff]
        %v602 = vld [vmem:[%s225 + $0xa18] sm:$0xff]
        %v603 = vld [vmem:[%s225 + $0xa20] sm:$0xff]
        %v604 = vld [vmem:[%s225 + $0xa28] sm:$0xff]
        %v605 = vld [vmem:[%s225 + $0xa30] sm:$0xff]
        %v606 = vld [vmem:[%s225 + $0xa38] sm:$0xff]
        %v607 = vld [vmem:[%s225 + $0xa40] sm:$0xff]
        %v608 = vld [vmem:[%s225 + $0xa48] sm:$0xff]
        %v609 = vld [vmem:[%s225 + $0xa50] sm:$0xff]
        %v610 = vld [vmem:[%s225 + $0xa58] sm:$0xff]
        %v611 = vld [vmem:[%s225 + $0xa60] sm:$0xff]
        %v612 = vld [vmem:[%s225 + $0xa68] sm:$0xff]
        %v613 = vld [vmem:[%s225 + $0xa70] sm:$0xff]
        %v614 = vld [vmem:[%s225 + $0xa78] sm:$0xff]
        %v615 = vld [vmem:[%s225 + $0xa80] sm:$0xff]
        %v616 = vld [vmem:[%s225 + $0xa88] sm:$0xff]
        %v617 = vld [vmem:[%s225 + $0xa90] sm:$0xff]
        %v618 = vld [vmem:[%s225 + $0xa98] sm:$0xff]
        %v619 = vld [vmem:[%s225 + $0xaa0] sm:$0xff]
        %v620 = vld [vmem:[%s225 + $0xaa8] sm:$0xff]
        %v621 = vld [vmem:[%s225 + $0xab0] sm:$0xff]
        %v622 = vld [vmem:[%s225 + $0xab8] sm:$0xff]
        %v623 = vld [vmem:[%s225 + $0xac0] sm:$0xff]
        %v624 = vld [vmem:[%s225 + $0xac8] sm:$0xff]
        %v625 = vld [vmem:[%s225 + $0xad0] sm:$0xff]
        %v626 = vld [vmem:[%s225 + $0xad8] sm:$0xff]
        %v627 = vld [vmem:[%s225 + $0xae0] sm:$0xff]
        %v628 = vld [vmem:[%s225 + $0xae8] sm:$0xff]
        %v629 = vld [vmem:[%s225 + $0xaf0] sm:$0xff]
        %v630 = vld [vmem:[%s225 + $0xaf8] sm:$0xff]
        %v631 = vld [vmem:[%s225 + $0xb00] sm:$0xff]
        %v632 = vld [vmem:[%s225 + $0xb08] sm:$0xff]
        %v633 = vld [vmem:[%s225 + $0xb10] sm:$0xff]
        %v634 = vld [vmem:[%s225 + $0xb18] sm:$0xff]
        %v635 = vld [vmem:[%s225 + $0xb20] sm:$0xff]
        %v636 = vld [vmem:[%s225 + $0xb28] sm:$0xff]
        %v637 = vld [vmem:[%s225 + $0xb30] sm:$0xff]
        %v638 = vld [vmem:[%s225 + $0xb38] sm:$0xff]
        %v639 = vld [vmem:[%s225 + $0xb40] sm:$0xff]
        %v640 = vld [vmem:[%s225 + $0xb48] sm:$0xff]
        %v641 = vld [vmem:[%s225 + $0xb50] sm:$0xff]
        %v642 = vld [vmem:[%s225 + $0xb58] sm:$0xff]
        %v643 = vld [vmem:[%s225 + $0xb60] sm:$0xff]
        %v644 = vld [vmem:[%s225 + $0xb68] sm:$0xff]
        %v645 = vld [vmem:[%s225 + $0xb70] sm:$0xff]
        %v646 = vld [vmem:[%s225 + $0xb78] sm:$0xff]
        %v647 = vld [vmem:[%s225 + $0xb80] sm:$0xff]
        %v648 = vld [vmem:[%s225 + $0xb88] sm:$0xff]
        %v649 = vld [vmem:[%s225 + $0xb90] sm:$0xff]
        %v650 = vld [vmem:[%s225 + $0xb98] sm:$0xff]
        %v651 = vld [vmem:[%s225 + $0xba0] sm:$0xff]
        %v652 = vld [vmem:[%s225 + $0xba8] sm:$0xff]
        %v653 = vld [vmem:[%s225 + $0xbb0] sm:$0xff]
        %v654 = vld [vmem:[%s225 + $0xbb8] sm:$0xff]
        %v655 = vld [vmem:[%s225 + $0xbc0] sm:$0xff]
        %v656 = vld [vmem:[%s225 + $0xbc8] sm:$0xff]
        %v657 = vld [vmem:[%s225 + $0xbd0] sm:$0xff]
        %v658 = vld [vmem:[%s225 + $0xbd8] sm:$0xff]
        %v659 = vld [vmem:[%s225 + $0xbe0] sm:$0xff]
        %v660 = vld [vmem:[%s225 + $0xbe8] sm:$0xff]
        %v661 = vld [vmem:[%s225 + $0xbf0] sm:$0xff]
        %v662 = vld [vmem:[%s225 + $0xbf8] sm:$0xff]
        %v663 = vld [vmem:[%s225 + $0xc00] sm:$0xff]
        %v664 = vld [vmem:[%s225 + $0xc08] sm:$0xff]
        %v665 = vld [vmem:[%s225 + $0xc10] sm:$0xff]
        %v666 = vld [vmem:[%s225 + $0xc18] sm:$0xff]
        %v667 = vld [vmem:[%s225 + $0xc20] sm:$0xff]
        %v668 = vld [vmem:[%s225 + $0xc28] sm:$0xff]
        %v669 = vld [vmem:[%s225 + $0xc30] sm:$0xff]
        %v670 = vld [vmem:[%s225 + $0xc38] sm:$0xff]
        %v671 = vld [vmem:[%s225 + $0xc40] sm:$0xff]
        %v672 = vld [vmem:[%s225 + $0xc48] sm:$0xff]
        %v673 = vld [vmem:[%s225 + $0xc50] sm:$0xff]
        %v674 = vld [vmem:[%s225 + $0xc58] sm:$0xff]
        %v675 = vld [vmem:[%s225 + $0xc60] sm:$0xff]
        %v676 = vld [vmem:[%s225 + $0xc68] sm:$0xff]
        %v677 = vld [vmem:[%s225 + $0xc70] sm:$0xff]
        %v678 = vld [vmem:[%s225 + $0xc78] sm:$0xff]
        %v679 = vld [vmem:[%s225 + $0xc80] sm:$0xff]
        %v680 = vld [vmem:[%s225 + $0xc88] sm:$0xff]
        %v681 = vld [vmem:[%s225 + $0xc90] sm:$0xff]
        %v682 = vld [vmem:[%s225 + $0xc98] sm:$0xff]
        %v683 = vld [vmem:[%s225 + $0xca0] sm:$0xff]
        %v684 = vld [vmem:[%s225 + $0xca8] sm:$0xff]
        %v685 = vld [vmem:[%s225 + $0xcb0] sm:$0xff]
        %v686 = vld [vmem:[%s225 + $0xcb8] sm:$0xff]
        %v687 = vld [vmem:[%s225 + $0xcc0] sm:$0xff]
        %v688 = vld [vmem:[%s225 + $0xcc8] sm:$0xff]
        %v689 = vld [vmem:[%s225 + $0xcd0] sm:$0xff]
        %v690 = vld [vmem:[%s225 + $0xcd8] sm:$0xff]
        %v691 = vld [vmem:[%s225 + $0xce0] sm:$0xff]
        %v692 = vld [vmem:[%s225 + $0xce8] sm:$0xff]
        %v693 = vld [vmem:[%s225 + $0xcf0] sm:$0xff]
        %v694 = vld [vmem:[%s225 + $0xcf8] sm:$0xff]
        %v695 = vld [vmem:[%s225 + $0xd00] sm:$0xff]
        %v696 = vld [vmem:[%s225 + $0xd08] sm:$0xff]
        %v697 = vld [vmem:[%s225 + $0xd10] sm:$0xff]
        %v698 = vld [vmem:[%s225 + $0xd18] sm:$0xff]
        %v699 = vld [vmem:[%s225 + $0xd20] sm:$0xff]
        %v700 = vld [vmem:[%s225 + $0xd28] sm:$0xff]
        %v701 = vld [vmem:[%s225 + $0xd30] sm:$0xff]
        %v702 = vld [vmem:[%s225 + $0xd38] sm:$0xff]
        %v703 = vld [vmem:[%s225 + $0xd40] sm:$0xff]
        %v704 = vld [vmem:[%s225 + $0xd48] sm:$0xff]
        %v705 = vld [vmem:[%s225 + $0xd50] sm:$0xff]
        %v706 = vld [vmem:[%s225 + $0xd58] sm:$0xff]
        %v707 = vld [vmem:[%s225 + $0xd60] sm:$0xff]
        %v708 = vld [vmem:[%s225 + $0xd68] sm:$0xff]
        %v709 = vld [vmem:[%s225 + $0xd70] sm:$0xff]
        %v710 = vld [vmem:[%s225 + $0xd78] sm:$0xff]
        %v711 = vld [vmem:[%s225 + $0xd80] sm:$0xff]
        %v712 = vld [vmem:[%s225 + $0xd88] sm:$0xff]
        %v713 = vld [vmem:[%s225 + $0xd90] sm:$0xff]
        %v714 = vld [vmem:[%s225 + $0xd98] sm:$0xff]
        %v715 = vld [vmem:[%s225 + $0xda0] sm:$0xff]
        %v716 = vld [vmem:[%s225 + $0xda8] sm:$0xff]
        %v717 = vld [vmem:[%s225 + $0xdb0] sm:$0xff]
        %v718 = vld [vmem:[%s225 + $0xdb8] sm:$0xff]
        %v719 = vld [vmem:[%s225 + $0xdc0] sm:$0xff]
        %v720 = vld [vmem:[%s225 + $0xdc8] sm:$0xff]
        %v721 = vld [vmem:[%s225 + $0xdd0] sm:$0xff]
        %v722 = vld [vmem:[%s225 + $0xdd8] sm:$0xff]
        %v723 = vld [vmem:[%s225 + $0xde0] sm:$0xff]
        %v724 = vld [vmem:[%s225 + $0xde8] sm:$0xff]
        %v725 = vld [vmem:[%s225 + $0xdf0] sm:$0xff]
        %v726 = vld [vmem:[%s225 + $0xdf8] sm:$0xff]
        %v727 = vld [vmem:[%s225 + $0xe00] sm:$0xff]
        %v728 = vld [vmem:[%s225 + $0xe08] sm:$0xff]
        %v729 = vld [vmem:[%s225 + $0xe10] sm:$0xff]
        %v730 = vld [vmem:[%s225 + $0xe18] sm:$0xff]
        %v731 = vld [vmem:[%s225 + $0xe20] sm:$0xff]
        %v732 = vld [vmem:[%s225 + $0xe28] sm:$0xff]
        %v733 = vld [vmem:[%s225 + $0xe30] sm:$0xff]
        %v734 = vld [vmem:[%s225 + $0xe38] sm:$0xff]
        %v735 = vld [vmem:[%s225 + $0xe40] sm:$0xff]
        %v736 = vld [vmem:[%s225 + $0xe48] sm:$0xff]
        %v737 = vld [vmem:[%s225 + $0xe50] sm:$0xff]
        %v738 = vld [vmem:[%s225 + $0xe58] sm:$0xff]
        %v739 = vld [vmem:[%s225 + $0xe60] sm:$0xff]
        %v740 = vld [vmem:[%s225 + $0xe68] sm:$0xff]
        %v741 = vld [vmem:[%s225 + $0xe70] sm:$0xff]
        %v742 = vld [vmem:[%s225 + $0xe78] sm:$0xff]
        %v743 = vld [vmem:[%s225 + $0xe80] sm:$0xff]
        %v744 = vld [vmem:[%s225 + $0xe88] sm:$0xff]
        %v745 = vld [vmem:[%s225 + $0xe90] sm:$0xff]
        %v746 = vld [vmem:[%s225 + $0xe98] sm:$0xff]
        %v747 = vld [vmem:[%s225 + $0xea0] sm:$0xff]
        %v748 = vld [vmem:[%s225 + $0xea8] sm:$0xff]
        %v749 = vld [vmem:[%s225 + $0xeb0] sm:$0xff]
        %v750 = vld [vmem:[%s225 + $0xeb8] sm:$0xff]
        %v751 = vld [vmem:[%s225 + $0xec0] sm:$0xff]
        %v752 = vld [vmem:[%s225 + $0xec8] sm:$0xff]
        %v753 = vld [vmem:[%s225 + $0xed0] sm:$0xff]
        %v754 = vld [vmem:[%s225 + $0xed8] sm:$0xff]
        %v755 = vld [vmem:[%s225 + $0xee0] sm:$0xff]
        %v756 = vld [vmem:[%s225 + $0xee8] sm:$0xff]
        %v757 = vld [vmem:[%s225 + $0xef0] sm:$0xff]
        %v758 = vld [vmem:[%s225 + $0xef8] sm:$0xff]
        %v759 = vld [vmem:[%s225 + $0xf00] sm:$0xff]
        %v760 = vld [vmem:[%s225 + $0xf08] sm:$0xff]
        %v761 = vld [vmem:[%s225 + $0xf10] sm:$0xff]
        %v762 = vld [vmem:[%s225 + $0xf18] sm:$0xff]
        %v763 = vld [vmem:[%s225 + $0xf20] sm:$0xff]
        %v764 = vld [vmem:[%s225 + $0xf28] sm:$0xff]
        %v765 = vld [vmem:[%s225 + $0xf30] sm:$0xff]
        %v766 = vld [vmem:[%s225 + $0xf38] sm:$0xff]
        %v767 = vld [vmem:[%s225 + $0xf40] sm:$0xff]
        %v768 = vld [vmem:[%s225 + $0xf48] sm:$0xff]
        %v769 = vld [vmem:[%s225 + $0xf50] sm:$0xff]
        %v770 = vld [vmem:[%s225 + $0xf58] sm:$0xff]
        %v771 = vld [vmem:[%s225 + $0xf60] sm:$0xff]
        %v772 = vld [vmem:[%s225 + $0xf68] sm:$0xff]
        %v773 = vld [vmem:[%s225 + $0xf70] sm:$0xff]
        %v774 = vld [vmem:[%s225 + $0xf78] sm:$0xff]
        %v775 = vld [vmem:[%s225 + $0xf80] sm:$0xff]
        %v776 = vld [vmem:[%s225 + $0xf88] sm:$0xff]
        %v777 = vld [vmem:[%s225 + $0xf90] sm:$0xff]
        %v778 = vld [vmem:[%s225 + $0xf98] sm:$0xff]
        %v779 = vld [vmem:[%s225 + $0xfa0] sm:$0xff]
        %v780 = vld [vmem:[%s225 + $0xfa8] sm:$0xff]
        %v781 = vld [vmem:[%s225 + $0xfb0] sm:$0xff]
        %v782 = vld [vmem:[%s225 + $0xfb8] sm:$0xff]
        %v783 = vld [vmem:[%s225 + $0xfc0] sm:$0xff]
        %v784 = vld [vmem:[%s225 + $0xfc8] sm:$0xff]
        %v785 = vld [vmem:[%s225 + $0xfd0] sm:$0xff]
        %v786 = vld [vmem:[%s225 + $0xfd8] sm:$0xff]
        %v787 = vld [vmem:[%s225 + $0xfe0] sm:$0xff]
        %v788 = vld [vmem:[%s225 + $0xfe8] sm:$0xff]
        %v789 = vld [vmem:[%s225 + $0xff0] sm:$0xff]
        %v790 = vld [vmem:[%s225 + $0xff8] sm:$0xff]
        %v791 = vld [vmem:[%s225 + $0x1000] sm:$0xff]
        %v792 = vld [vmem:[%s225 + $0x1008] sm:$0xff]
        %v793 = vld [vmem:[%s225 + $0x1010] sm:$0xff]
        %v794 = vld [vmem:[%s225 + $0x1018] sm:$0xff]
        %v795 = vld [vmem:[%s225 + $0x1020] sm:$0xff]
        %v796 = vld [vmem:[%s225 + $0x1028] sm:$0xff]
        %v797 = vld [vmem:[%s225 + $0x1030] sm:$0xff]
        %v798 = vld [vmem:[%s225 + $0x1038] sm:$0xff]
        %v799 = vld [vmem:[%s225 + $0x1040] sm:$0xff]
        %v800 = vld [vmem:[%s225 + $0x1048] sm:$0xff]
        %v801 = vld [vmem:[%s225 + $0x1050] sm:$0xff]
        %v802 = vld [vmem:[%s225 + $0x1058] sm:$0xff]
        %v803 = vld [vmem:[%s225 + $0x1060] sm:$0xff]
        %v804 = vld [vmem:[%s225 + $0x1068] sm:$0xff]
        %v805 = vld [vmem:[%s225 + $0x1070] sm:$0xff]
        %v806 = vld [vmem:[%s225 + $0x1078] sm:$0xff]
        %v807 = vld [vmem:[%s225 + $0x1080] sm:$0xff]
        %v808 = vld [vmem:[%s225 + $0x1088] sm:$0xff]
        %v809 = vld [vmem:[%s225 + $0x1090] sm:$0xff]
        %v810 = vld [vmem:[%s225 + $0x1098] sm:$0xff]
        %v811 = vld [vmem:[%s225 + $0x10a0] sm:$0xff]
        %v812 = vld [vmem:[%s225 + $0x10a8] sm:$0xff]
        %v813 = vld [vmem:[%s225 + $0x10b0] sm:$0xff]
        %v814 = vld [vmem:[%s225 + $0x10b8] sm:$0xff]
        %v815 = vld [vmem:[%s225 + $0x10c0] sm:$0xff]
        %v816 = vld [vmem:[%s225 + $0x10c8] sm:$0xff]
        %v817 = vld [vmem:[%s225 + $0x10d0] sm:$0xff]
        %v818 = vld [vmem:[%s225 + $0x10d8] sm:$0xff]
        %v819 = vld [vmem:[%s225 + $0x10e0] sm:$0xff]
        %v820 = vld [vmem:[%s225 + $0x10e8] sm:$0xff]
        %v821 = vld [vmem:[%s225 + $0x10f0] sm:$0xff]
        %v822 = vld [vmem:[%s225 + $0x10f8] sm:$0xff]
        %v823 = vld [vmem:[%s225 + $0x1100] sm:$0xff]
        %v824 = vld [vmem:[%s225 + $0x1108] sm:$0xff]
        %v825 = vld [vmem:[%s225 + $0x1110] sm:$0xff]
        %v826 = vld [vmem:[%s225 + $0x1118] sm:$0xff]
        %v827 = vld [vmem:[%s225 + $0x1120] sm:$0xff]
        %v828 = vld [vmem:[%s225 + $0x1128] sm:$0xff]
        %v829 = vld [vmem:[%s225 + $0x1130] sm:$0xff]
        %v830 = vld [vmem:[%s225 + $0x1138] sm:$0xff]
        %v831 = vld [vmem:[%s225 + $0x1140] sm:$0xff]
        %v832 = vld [vmem:[%s225 + $0x1148] sm:$0xff]
        %v833 = vld [vmem:[%s225 + $0x1150] sm:$0xff]
        %v834 = vld [vmem:[%s225 + $0x1158] sm:$0xff]
        %v835 = vld [vmem:[%s225 + $0x1160] sm:$0xff]
        %v836 = vld [vmem:[%s225 + $0x1168] sm:$0xff]
        %v837 = vld [vmem:[%s225 + $0x1170] sm:$0xff]
        %v838 = vld [vmem:[%s225 + $0x1178] sm:$0xff]
        %v839 = vld [vmem:[%s225 + $0x1180] sm:$0xff]
        %v840 = vld [vmem:[%s225 + $0x1188] sm:$0xff]
        %v841 = vld [vmem:[%s225 + $0x1190] sm:$0xff]
        %v842 = vld [vmem:[%s225 + $0x1198] sm:$0xff]
        %v843 = vld [vmem:[%s225 + $0x11a0] sm:$0xff]
        %v844 = vld [vmem:[%s225 + $0x11a8] sm:$0xff]
        %v845 = vld [vmem:[%s225 + $0x11b0] sm:$0xff]
        %v846 = vld [vmem:[%s225 + $0x11b8] sm:$0xff]
        %v847 = vld [vmem:[%s225 + $0x11c0] sm:$0xff]
        %v848 = vld [vmem:[%s225 + $0x11c8] sm:$0xff]
        %v849 = vld [vmem:[%s225 + $0x11d0] sm:$0xff]
        %v850 = vld [vmem:[%s225 + $0x11d8] sm:$0xff]
        %v851 = vld [vmem:[%s225 + $0x11e0] sm:$0xff]
        %v852 = vld [vmem:[%s225 + $0x11e8] sm:$0xff]
        %v853 = vld [vmem:[%s225 + $0x11f0] sm:$0xff]
        %v854 = vld [vmem:[%s225 + $0x11f8] sm:$0xff]
        %v855 = vld [vmem:[%s234] sm:$0x3f]
        %v857 = vlaneseq
        %v858 = vshrl.u32 %v857, 7
        %v859 = vsub.s32 0, %v858
        %v860 = vrot.slane %v855, %v859
        %v861 = vlaneseq
        %v862 = vshrl.u32 %v861, 7
        %v863 = vsub.s32 1, %v862
        %v864 = vrot.slane %v855, %v863
        %v865 = vlaneseq
        %v866 = vshrl.u32 %v865, 7
        %v867 = vsub.s32 2, %v866
        %v868 = vrot.slane %v855, %v867
        %v869 = vlaneseq
        %v870 = vshrl.u32 %v869, 7
        %v871 = vsub.s32 3, %v870
        %v872 = vrot.slane %v855, %v871
        %v873 = vlaneseq
        %v874 = vshrl.u32 %v873, 7
        %v875 = vsub.s32 4, %v874
        %v876 = vrot.slane %v855, %v875
        %v877 = vlaneseq
        %v878 = vshrl.u32 %v877, 7
        %v879 = vsub.s32 5, %v878
        %v880 = vrot.slane %v855, %v879
        %887 = vmatprep.subr.mxu0 %v370
        %888 = vmatpush1.msra.mxu0 %v369
        %889 = vmatprep.subr.mxu0 %v364
        %890 = vmatpush1.msra.mxu0 %v363
        %891 = vmatprep.subr.mxu0 %v358
        %892 = vmatpush1.msra.mxu0 %v357
        %893 = vmatprep.subr.mxu0 %v352
        %894 = vmatpush1.msra.mxu0 %v351
        %895 = vmatprep.subr.mxu0 %v346
        %896 = vmatpush1.msra.mxu0 %v345
        %897 = vmatprep.subr.mxu0 %v340
        %898 = vmatpush1.msra.mxu0 %v339
        %899 = vmatprep.subr.mxu0 %v334
        %900 = vmatpush1.msra.mxu0 %v333
        %901 = vmatprep.subr.mxu0 %v328
        %902 = vmatpush1.msra.mxu0 %v327
        %903 = vmatprep.subr.mxu0 %v322
        %904 = vmatpush1.msra.mxu0 %v321
        %905 = vmatprep.subr.mxu0 %v316
        %906 = vmatpush1.msra.mxu0 %v315
        %907 = vmatprep.subr.mxu0 %v310
        %908 = vmatpush1.msra.mxu0 %v309
        %909 = vmatprep.subr.mxu0 %v304
        %910 = vmatpush1.msra.mxu0 %v303
        %911 = vmatprep.subr.mxu0 %v298
        %912 = vmatpush1.msra.mxu0 %v297
        %913 = vmatprep.subr.mxu0 %v292
        %914 = vmatpush1.msra.mxu0 %v291
        %915 = vmatprep.subr.mxu0 %v286
        %916 = vmatpush1.msra.mxu0 %v285
        %917 = vmatprep.subr.mxu0 %v280
        %918 = vmatpush1.msra.mxu0 %v279
        %919 = vmatprep.subr.mxu0 %v466
        %920 = vmatpush2.msra.mxu0 %v465
        %921 = vmatprep.subr.mxu0 %v460
        %922 = vmatpush2.msra.mxu0 %v459
        %923 = vmatprep.subr.mxu0 %v454
        %924 = vmatpush2.msra.mxu0 %v453
        %925 = vmatprep.subr.mxu0 %v448
        %926 = vmatpush2.msra.mxu0 %v447
        %927 = vmatprep.subr.mxu0 %v442
        %928 = vmatpush2.msra.mxu0 %v441
        %929 = vmatprep.subr.mxu0 %v436
        %930 = vmatpush2.msra.mxu0 %v435
        %931 = vmatprep.subr.mxu0 %v430
        %932 = vmatpush2.msra.mxu0 %v429
        %933 = vmatprep.subr.mxu0 %v424
        %934 = vmatpush2.msra.mxu0 %v423
        %935 = vmatprep.subr.mxu0 %v418
        %936 = vmatpush2.msra.mxu0 %v417
        %937 = vmatprep.subr.mxu0 %v412
        %938 = vmatpush2.msra.mxu0 %v411
        %939 = vmatprep.subr.mxu0 %v406
        %940 = vmatpush2.msra.mxu0 %v405
        %941 = vmatprep.subr.mxu0 %v400
        %942 = vmatpush2.msra.mxu0 %v399
        %943 = vmatprep.subr.mxu0 %v394
        %944 = vmatpush2.msra.mxu0 %v393
        %945 = vmatprep.subr.mxu0 %v388
        %946 = vmatpush2.msra.mxu0 %v387
        %947 = vmatprep.subr.mxu0 %v382
        %948 = vmatpush2.msra.mxu0 %v381
        %949 = vmatprep.subr.mxu0 %v376
        %950 = vmatpush2.msra.mxu0 %v375
        %951 = vmatprep.mubr.f32.mxu0 %v268
        %952 = vmatmul.mubr.f32.gmra.mxu0 %v267
        %v953 = vpop.f32.mrf.mxu0
        %v954 = vadd.f32 %v860, %v953
        %v955 = vpop.f32.mrf.mxu0
        %v956 = vadd.f32 %v864, %v955
        %957 = vmatprep.mubr.f32.mxu0 %v274
        %958 = vmatmul.mubr.f32.gmra.mxu0 %v273
        %v959 = vpop.f32.mrf.mxu0
        %v960 = vadd.f32 %v860, %v959
        %v961 = vpop.f32.mrf.mxu0
        %v962 = vadd.f32 %v864, %v961
        %963 = vdwg.mxu0
        %964 = vmatprep.subr.mxu0 %v562
        %965 = vmatpush1.msra.mxu0 %v561
        %966 = vmatprep.subr.mxu0 %v556
        %967 = vmatpush1.msra.mxu0 %v555
        %968 = vmatprep.subr.mxu0 %v550
        %969 = vmatpush1.msra.mxu0 %v549
        %970 = vmatprep.subr.mxu0 %v544
        %971 = vmatpush1.msra.mxu0 %v543
        %972 = vmatprep.subr.mxu0 %v538
        %973 = vmatpush1.msra.mxu0 %v537
        %974 = vmatprep.subr.mxu0 %v532
        %975 = vmatpush1.msra.mxu0 %v531
        %976 = vmatprep.subr.mxu0 %v526
        %977 = vmatpush1.msra.mxu0 %v525
        %978 = vmatprep.subr.mxu0 %v520
        %979 = vmatpush1.msra.mxu0 %v519
        %980 = vmatprep.subr.mxu0 %v514
        %981 = vmatpush1.msra.mxu0 %v513
        %982 = vmatprep.subr.mxu0 %v508
        %983 = vmatpush1.msra.mxu0 %v507
        %984 = vmatprep.subr.mxu0 %v502
        %985 = vmatpush1.msra.mxu0 %v501
        %986 = vmatprep.subr.mxu0 %v496
        %987 = vmatpush1.msra.mxu0 %v495
        %988 = vmatprep.subr.mxu0 %v490
        %989 = vmatpush1.msra.mxu0 %v489
        %990 = vmatprep.subr.mxu0 %v484
        %991 = vmatpush1.msra.mxu0 %v483
        %992 = vmatprep.subr.mxu0 %v478
        %993 = vmatpush1.msra.mxu0 %v477
        %994 = vmatprep.subr.mxu0 %v472
        %995 = vmatpush1.msra.mxu0 %v471
        %996 = vmatprep.subr.mxu0 %v658
        %997 = vmatpush2.msra.mxu0 %v657
        %998 = vmatprep.subr.mxu0 %v652
        %999 = vmatpush2.msra.mxu0 %v651
        %1000 = vmatprep.subr.mxu0 %v646
        %1001 = vmatpush2.msra.mxu0 %v645
        %1002 = vmatprep.subr.mxu0 %v640
        %1003 = vmatpush2.msra.mxu0 %v639
        %1004 = vmatprep.subr.mxu0 %v634
        %1005 = vmatpush2.msra.mxu0 %v633
        %1006 = vmatprep.subr.mxu0 %v628
        %1007 = vmatpush2.msra.mxu0 %v627
        %1008 = vmatprep.subr.mxu0 %v622
        %1009 = vmatpush2.msra.mxu0 %v621
        %1010 = vmatprep.subr.mxu0 %v616
        %1011 = vmatpush2.msra.mxu0 %v615
        %1012 = vmatprep.subr.mxu0 %v610
        %1013 = vmatpush2.msra.mxu0 %v609
        %1014 = vmatprep.subr.mxu0 %v604
        %1015 = vmatpush2.msra.mxu0 %v603
        %1016 = vmatprep.subr.mxu0 %v598
        %1017 = vmatpush2.msra.mxu0 %v597
        %1018 = vmatprep.subr.mxu0 %v592
        %1019 = vmatpush2.msra.mxu0 %v591
        %1020 = vmatprep.subr.mxu0 %v586
        %1021 = vmatpush2.msra.mxu0 %v585
        %1022 = vmatprep.subr.mxu0 %v580
        %1023 = vmatpush2.msra.mxu0 %v579
        %1024 = vmatprep.subr.mxu0 %v574
        %1025 = vmatpush2.msra.mxu0 %v573
        %1026 = vmatprep.subr.mxu0 %v568
        %1027 = vmatpush2.msra.mxu0 %v567
        %1028 = vmatprep.mubr.f32.mxu0 %v270
        %1029 = vmatmul.mubr.f32.gmra.mxu0 %v269
        %v1030 = vpop.f32.mrf.mxu0
        %v1031 = vadd.f32 %v954, %v1030
        %v1032 = vpop.f32.mrf.mxu0
        %v1033 = vadd.f32 %v956, %v1032
        %1034 = vmatprep.mubr.f32.mxu0 %v276
        %1035 = vmatmul.mubr.f32.gmra.mxu0 %v275
        %v1036 = vpop.f32.mrf.mxu0
        %v1037 = vadd.f32 %v960, %v1036
        %v1038 = vpop.f32.mrf.mxu0
        %v1039 = vadd.f32 %v962, %v1038
        %1040 = vdwg.mxu0
        %1041 = vmatprep.subr.mxu0 %v754
        %1042 = vmatpush1.msra.mxu0 %v753
        %1043 = vmatprep.subr.mxu0 %v748
        %1044 = vmatpush1.msra.mxu0 %v747
        %1045 = vmatprep.subr.mxu0 %v742
        %1046 = vmatpush1.msra.mxu0 %v741
        %1047 = vmatprep.subr.mxu0 %v736
        %1048 = vmatpush1.msra.mxu0 %v735
        %1049 = vmatprep.subr.mxu0 %v730
        %1050 = vmatpush1.msra.mxu0 %v729
        %1051 = vmatprep.subr.mxu0 %v724
        %1052 = vmatpush1.msra.mxu0 %v723
        %1053 = vmatprep.subr.mxu0 %v718
        %1054 = vmatpush1.msra.mxu0 %v717
        %1055 = vmatprep.subr.mxu0 %v712
        %1056 = vmatpush1.msra.mxu0 %v711
        %1057 = vmatprep.subr.mxu0 %v706
        %1058 = vmatpush1.msra.mxu0 %v705
        %1059 = vmatprep.subr.mxu0 %v700
        %1060 = vmatpush1.msra.mxu0 %v699
        %1061 = vmatprep.subr.mxu0 %v694
        %1062 = vmatpush1.msra.mxu0 %v693
        %1063 = vmatprep.subr.mxu0 %v688
        %1064 = vmatpush1.msra.mxu0 %v687
        %1065 = vmatprep.subr.mxu0 %v682
        %1066 = vmatpush1.msra.mxu0 %v681
        %1067 = vmatprep.subr.mxu0 %v676
        %1068 = vmatpush1.msra.mxu0 %v675
        %1069 = vmatprep.subr.mxu0 %v670
        %1070 = vmatpush1.msra.mxu0 %v669
        %1071 = vmatprep.subr.mxu0 %v664
        %1072 = vmatpush1.msra.mxu0 %v663
        %1073 = vmatprep.subr.mxu0 %v850
        %1074 = vmatpush2.msra.mxu0 %v849
        %1075 = vmatprep.subr.mxu0 %v844
        %1076 = vmatpush2.msra.mxu0 %v843
        %1077 = vmatprep.subr.mxu0 %v838
        %1078 = vmatpush2.msra.mxu0 %v837
        %1079 = vmatprep.subr.mxu0 %v832
        %1080 = vmatpush2.msra.mxu0 %v831
        %1081 = vmatprep.subr.mxu0 %v826
        %1082 = vmatpush2.msra.mxu0 %v825
        %1083 = vmatprep.subr.mxu0 %v820
        %1084 = vmatpush2.msra.mxu0 %v819
        %1085 = vmatprep.subr.mxu0 %v814
        %1086 = vmatpush2.msra.mxu0 %v813
        %1087 = vmatprep.subr.mxu0 %v808
        %1088 = vmatpush2.msra.mxu0 %v807
        %1089 = vmatprep.subr.mxu0 %v802
        %1090 = vmatpush2.msra.mxu0 %v801
        %1091 = vmatprep.subr.mxu0 %v796
        %1092 = vmatpush2.msra.mxu0 %v795
        %1093 = vmatprep.subr.mxu0 %v790
        %1094 = vmatpush2.msra.mxu0 %v789
        %1095 = vmatprep.subr.mxu0 %v784
        %1096 = vmatpush2.msra.mxu0 %v783
        %1097 = vmatprep.subr.mxu0 %v778
        %1098 = vmatpush2.msra.mxu0 %v777
        %1099 = vmatprep.subr.mxu0 %v772
        %1100 = vmatpush2.msra.mxu0 %v771
        %1101 = vmatprep.subr.mxu0 %v766
        %1102 = vmatpush2.msra.mxu0 %v765
        %1103 = vmatprep.subr.mxu0 %v760
        %1104 = vmatpush2.msra.mxu0 %v759
        %1105 = vmatprep.mubr.f32.mxu0 %v272
        %1106 = vmatmul.mubr.f32.gmra.mxu0 %v271
        %v1107 = vpop.f32.mrf.mxu0
        %v1108 = vadd.f32 %v1031, %v1107
        %v1109 = vpop.f32.mrf.mxu0
        %v1110 = vadd.f32 %v1033, %v1109
        %1111 = vmatprep.mubr.f32.mxu0 %v278
        %1112 = vmatmul.mubr.f32.gmra.mxu0 %v277
        %v1113 = vpop.f32.mrf.mxu0
        %v1114 = vadd.f32 %v1037, %v1113
        %v1115 = vpop.f32.mrf.mxu0
        %v1116 = vadd.f32 %v1039, %v1115
        %1117 = vdwg.mxu0
        %1118 = vmatprep.subr.mxu0 %v372
        %1119 = vmatpush1.msra.mxu0 %v371
        %1120 = vmatprep.subr.mxu0 %v366
        %1121 = vmatpush1.msra.mxu0 %v365
        %1122 = vmatprep.subr.mxu0 %v360
        %1123 = vmatpush1.msra.mxu0 %v359
        %1124 = vmatprep.subr.mxu0 %v354
        %1125 = vmatpush1.msra.mxu0 %v353
        %1126 = vmatprep.subr.mxu0 %v348
        %1127 = vmatpush1.msra.mxu0 %v347
        %1128 = vmatprep.subr.mxu0 %v342
        %1129 = vmatpush1.msra.mxu0 %v341
        %1130 = vmatprep.subr.mxu0 %v336
        %1131 = vmatpush1.msra.mxu0 %v335
        %1132 = vmatprep.subr.mxu0 %v330
        %1133 = vmatpush1.msra.mxu0 %v329
        %1134 = vmatprep.subr.mxu0 %v324
        %1135 = vmatpush1.msra.mxu0 %v323
        %1136 = vmatprep.subr.mxu0 %v318
        %1137 = vmatpush1.msra.mxu0 %v317
        %1138 = vmatprep.subr.mxu0 %v312
        %1139 = vmatpush1.msra.mxu0 %v311
        %1140 = vmatprep.subr.mxu0 %v306
        %1141 = vmatpush1.msra.mxu0 %v305
        %1142 = vmatprep.subr.mxu0 %v300
        %1143 = vmatpush1.msra.mxu0 %v299
        %1144 = vmatprep.subr.mxu0 %v294
        %1145 = vmatpush1.msra.mxu0 %v293
        %1146 = vmatprep.subr.mxu0 %v288
        %1147 = vmatpush1.msra.mxu0 %v287
        %1148 = vmatprep.subr.mxu0 %v282
        %1149 = vmatpush1.msra.mxu0 %v281
        %1150 = vmatprep.subr.mxu0 %v468
        %1151 = vmatpush2.msra.mxu0 %v467
        %1152 = vmatprep.subr.mxu0 %v462
        %1153 = vmatpush2.msra.mxu0 %v461
        %1154 = vmatprep.subr.mxu0 %v456
        %1155 = vmatpush2.msra.mxu0 %v455
        %1156 = vmatprep.subr.mxu0 %v450
        %1157 = vmatpush2.msra.mxu0 %v449
        %1158 = vmatprep.subr.mxu0 %v444
        %1159 = vmatpush2.msra.mxu0 %v443
        %1160 = vmatprep.subr.mxu0 %v438
        %1161 = vmatpush2.msra.mxu0 %v437
        %1162 = vmatprep.subr.mxu0 %v432
        %1163 = vmatpush2.msra.mxu0 %v431
        %1164 = vmatprep.subr.mxu0 %v426
        %1165 = vmatpush2.msra.mxu0 %v425
        %1166 = vmatprep.subr.mxu0 %v420
        %1167 = vmatpush2.msra.mxu0 %v419
        %1168 = vmatprep.subr.mxu0 %v414
        %1169 = vmatpush2.msra.mxu0 %v413
        %1170 = vmatprep.subr.mxu0 %v408
        %1171 = vmatpush2.msra.mxu0 %v407
        %1172 = vmatprep.subr.mxu0 %v402
        %1173 = vmatpush2.msra.mxu0 %v401
        %1174 = vmatprep.subr.mxu0 %v396
        %1175 = vmatpush2.msra.mxu0 %v395
        %1176 = vmatprep.subr.mxu0 %v390
        %1177 = vmatpush2.msra.mxu0 %v389
        %1178 = vmatprep.subr.mxu0 %v384
        %1179 = vmatpush2.msra.mxu0 %v383
        %1180 = vmatprep.subr.mxu0 %v378
        %1181 = vmatpush2.msra.mxu0 %v377
        %1182 = vmatprep.mubr.f32.mxu0 %v268
        %1183 = vmatmul.mubr.f32.gmra.mxu0 %v267
        %v1184 = vpop.f32.mrf.mxu0
        %v1185 = vadd.f32 %v868, %v1184
        %v1186 = vpop.f32.mrf.mxu0
        %v1187 = vadd.f32 %v872, %v1186
        %1188 = vmatprep.mubr.f32.mxu0 %v274
        %1189 = vmatmul.mubr.f32.gmra.mxu0 %v273
        %v1190 = vpop.f32.mrf.mxu0
        %v1191 = vadd.f32 %v868, %v1190
        %v1192 = vpop.f32.mrf.mxu0
        %v1193 = vadd.f32 %v872, %v1192
        %1194 = vdwg.mxu0
        %1195 = vmatprep.subr.mxu0 %v564
        %1196 = vmatpush1.msra.mxu0 %v563
        %1197 = vmatprep.subr.mxu0 %v558
        %1198 = vmatpush1.msra.mxu0 %v557
        %1199 = vmatprep.subr.mxu0 %v552
        %1200 = vmatpush1.msra.mxu0 %v551
        %1201 = vmatprep.subr.mxu0 %v546
        %1202 = vmatpush1.msra.mxu0 %v545
        %1203 = vmatprep.subr.mxu0 %v540
        %1204 = vmatpush1.msra.mxu0 %v539
        %1205 = vmatprep.subr.mxu0 %v534
        %1206 = vmatpush1.msra.mxu0 %v533
        %1207 = vmatprep.subr.mxu0 %v528
        %1208 = vmatpush1.msra.mxu0 %v527
        %1209 = vmatprep.subr.mxu0 %v522
        %1210 = vmatpush1.msra.mxu0 %v521
        %1211 = vmatprep.subr.mxu0 %v516
        %1212 = vmatpush1.msra.mxu0 %v515
        %1213 = vmatprep.subr.mxu0 %v510
        %1214 = vmatpush1.msra.mxu0 %v509
        %1215 = vmatprep.subr.mxu0 %v504
        %1216 = vmatpush1.msra.mxu0 %v503
        %1217 = vmatprep.subr.mxu0 %v498
        %1218 = vmatpush1.msra.mxu0 %v497
        %1219 = vmatprep.subr.mxu0 %v492
        %1220 = vmatpush1.msra.mxu0 %v491
        %1221 = vmatprep.subr.mxu0 %v486
        %1222 = vmatpush1.msra.mxu0 %v485
        %1223 = vmatprep.subr.mxu0 %v480
        %1224 = vmatpush1.msra.mxu0 %v479
        %1225 = vmatprep.subr.mxu0 %v474
        %1226 = vmatpush1.msra.mxu0 %v473
        %1227 = vmatprep.subr.mxu0 %v660
        %1228 = vmatpush2.msra.mxu0 %v659
        %1229 = vmatprep.subr.mxu0 %v654
        %1230 = vmatpush2.msra.mxu0 %v653
        %1231 = vmatprep.subr.mxu0 %v648
        %1232 = vmatpush2.msra.mxu0 %v647
        %1233 = vmatprep.subr.mxu0 %v642
        %1234 = vmatpush2.msra.mxu0 %v641
        %1235 = vmatprep.subr.mxu0 %v636
        %1236 = vmatpush2.msra.mxu0 %v635
        %1237 = vmatprep.subr.mxu0 %v630
        %1238 = vmatpush2.msra.mxu0 %v629
        %1239 = vmatprep.subr.mxu0 %v624
        %1240 = vmatpush2.msra.mxu0 %v623
        %1241 = vmatprep.subr.mxu0 %v618
        %1242 = vmatpush2.msra.mxu0 %v617
        %1243 = vmatprep.subr.mxu0 %v612
        %1244 = vmatpush2.msra.mxu0 %v611
        %1245 = vmatprep.subr.mxu0 %v606
        %1246 = vmatpush2.msra.mxu0 %v605
        %1247 = vmatprep.subr.mxu0 %v600
        %1248 = vmatpush2.msra.mxu0 %v599
        %1249 = vmatprep.subr.mxu0 %v594
        %1250 = vmatpush2.msra.mxu0 %v593
        %1251 = vmatprep.subr.mxu0 %v588
        %1252 = vmatpush2.msra.mxu0 %v587
        %1253 = vmatprep.subr.mxu0 %v582
        %1254 = vmatpush2.msra.mxu0 %v581
        %1255 = vmatprep.subr.mxu0 %v576
        %1256 = vmatpush2.msra.mxu0 %v575
        %1257 = vmatprep.subr.mxu0 %v570
        %1258 = vmatpush2.msra.mxu0 %v569
        %1259 = vmatprep.mubr.f32.mxu0 %v270
        %1260 = vmatmul.mubr.f32.gmra.mxu0 %v269
        %v1261 = vpop.f32.mrf.mxu0
        %v1262 = vadd.f32 %v1185, %v1261
        %v1263 = vpop.f32.mrf.mxu0
        %v1264 = vadd.f32 %v1187, %v1263
        %1265 = vmatprep.mubr.f32.mxu0 %v276
        %1266 = vmatmul.mubr.f32.gmra.mxu0 %v275
        %v1267 = vpop.f32.mrf.mxu0
        %v1268 = vadd.f32 %v1191, %v1267
        %v1269 = vpop.f32.mrf.mxu0
        %v1270 = vadd.f32 %v1193, %v1269
        %1271 = vdwg.mxu0
        %1272 = vmatprep.subr.mxu0 %v756
        %1273 = vmatpush1.msra.mxu0 %v755
        %1274 = vmatprep.subr.mxu0 %v750
        %1275 = vmatpush1.msra.mxu0 %v749
        %1276 = vmatprep.subr.mxu0 %v744
        %1277 = vmatpush1.msra.mxu0 %v743
        %1278 = vmatprep.subr.mxu0 %v738
        %1279 = vmatpush1.msra.mxu0 %v737
        %1280 = vmatprep.subr.mxu0 %v732
        %1281 = vmatpush1.msra.mxu0 %v731
        %1282 = vmatprep.subr.mxu0 %v726
        %1283 = vmatpush1.msra.mxu0 %v725
        %1284 = vmatprep.subr.mxu0 %v720
        %1285 = vmatpush1.msra.mxu0 %v719
        %1286 = vmatprep.subr.mxu0 %v714
        %1287 = vmatpush1.msra.mxu0 %v713
        %1288 = vmatprep.subr.mxu0 %v708
        %1289 = vmatpush1.msra.mxu0 %v707
        %1290 = vmatprep.subr.mxu0 %v702
        %1291 = vmatpush1.msra.mxu0 %v701
        %1292 = vmatprep.subr.mxu0 %v696
        %1293 = vmatpush1.msra.mxu0 %v695
        %1294 = vmatprep.subr.mxu0 %v690
        %1295 = vmatpush1.msra.mxu0 %v689
        %1296 = vmatprep.subr.mxu0 %v684
        %1297 = vmatpush1.msra.mxu0 %v683
        %1298 = vmatprep.subr.mxu0 %v678
        %1299 = vmatpush1.msra.mxu0 %v677
        %1300 = vmatprep.subr.mxu0 %v672
        %1301 = vmatpush1.msra.mxu0 %v671
        %1302 = vmatprep.subr.mxu0 %v666
        %1303 = vmatpush1.msra.mxu0 %v665
        %1304 = vmatprep.subr.mxu0 %v852
        %1305 = vmatpush2.msra.mxu0 %v851
        %1306 = vmatprep.subr.mxu0 %v846
        %1307 = vmatpush2.msra.mxu0 %v845
        %1308 = vmatprep.subr.mxu0 %v840
        %1309 = vmatpush2.msra.mxu0 %v839
        %1310 = vmatprep.subr.mxu0 %v834
        %1311 = vmatpush2.msra.mxu0 %v833
        %1312 = vmatprep.subr.mxu0 %v828
        %1313 = vmatpush2.msra.mxu0 %v827
        %1314 = vmatprep.subr.mxu0 %v822
        %1315 = vmatpush2.msra.mxu0 %v821
        %1316 = vmatprep.subr.mxu0 %v816
        %1317 = vmatpush2.msra.mxu0 %v815
        %1318 = vmatprep.subr.mxu0 %v810
        %1319 = vmatpush2.msra.mxu0 %v809
        %1320 = vmatprep.subr.mxu0 %v804
        %1321 = vmatpush2.msra.mxu0 %v803
        %1322 = vmatprep.subr.mxu0 %v798
        %1323 = vmatpush2.msra.mxu0 %v797
        %1324 = vmatprep.subr.mxu0 %v792
        %1325 = vmatpush2.msra.mxu0 %v791
        %1326 = vmatprep.subr.mxu0 %v786
        %1327 = vmatpush2.msra.mxu0 %v785
        %1328 = vmatprep.subr.mxu0 %v780
        %1329 = vmatpush2.msra.mxu0 %v779
        %1330 = vmatprep.subr.mxu0 %v774
        %1331 = vmatpush2.msra.mxu0 %v773
        %1332 = vmatprep.subr.mxu0 %v768
        %1333 = vmatpush2.msra.mxu0 %v767
        %1334 = vmatprep.subr.mxu0 %v762
        %1335 = vmatpush2.msra.mxu0 %v761
        %1336 = vmatprep.mubr.f32.mxu0 %v272
        %1337 = vmatmul.mubr.f32.gmra.mxu0 %v271
        %v1338 = vpop.f32.mrf.mxu0
        %v1339 = vadd.f32 %v1262, %v1338
        %v1340 = vpop.f32.mrf.mxu0
        %v1341 = vadd.f32 %v1264, %v1340
        %1342 = vmatprep.mubr.f32.mxu0 %v278
        %1343 = vmatmul.mubr.f32.gmra.mxu0 %v277
        %v1344 = vpop.f32.mrf.mxu0
        %v1345 = vadd.f32 %v1268, %v1344
        %v1346 = vpop.f32.mrf.mxu0
        %v1347 = vadd.f32 %v1270, %v1346
        %1348 = vdwg.mxu0
        %1349 = vmatprep.subr.mxu0 %v374
        %1350 = vmatpush1.msra.mxu0 %v373
        %1351 = vmatprep.subr.mxu0 %v368
        %1352 = vmatpush1.msra.mxu0 %v367
        %1353 = vmatprep.subr.mxu0 %v362
        %1354 = vmatpush1.msra.mxu0 %v361
        %1355 = vmatprep.subr.mxu0 %v356
        %1356 = vmatpush1.msra.mxu0 %v355
        %1357 = vmatprep.subr.mxu0 %v350
        %1358 = vmatpush1.msra.mxu0 %v349
        %1359 = vmatprep.subr.mxu0 %v344
        %1360 = vmatpush1.msra.mxu0 %v343
        %1361 = vmatprep.subr.mxu0 %v338
        %1362 = vmatpush1.msra.mxu0 %v337
        %1363 = vmatprep.subr.mxu0 %v332
        %1364 = vmatpush1.msra.mxu0 %v331
        %1365 = vmatprep.subr.mxu0 %v326
        %1366 = vmatpush1.msra.mxu0 %v325
        %1367 = vmatprep.subr.mxu0 %v320
        %1368 = vmatpush1.msra.mxu0 %v319
        %1369 = vmatprep.subr.mxu0 %v314
        %1370 = vmatpush1.msra.mxu0 %v313
        %1371 = vmatprep.subr.mxu0 %v308
        %1372 = vmatpush1.msra.mxu0 %v307
        %1373 = vmatprep.subr.mxu0 %v302
        %1374 = vmatpush1.msra.mxu0 %v301
        %1375 = vmatprep.subr.mxu0 %v296
        %1376 = vmatpush1.msra.mxu0 %v295
        %1377 = vmatprep.subr.mxu0 %v290
        %1378 = vmatpush1.msra.mxu0 %v289
        %1379 = vmatprep.subr.mxu0 %v284
        %1380 = vmatpush1.msra.mxu0 %v283
        %1381 = vmatprep.subr.mxu0 %v470
        %1382 = vmatpush2.msra.mxu0 %v469
        %1383 = vmatprep.subr.mxu0 %v464
        %1384 = vmatpush2.msra.mxu0 %v463
        %1385 = vmatprep.subr.mxu0 %v458
        %1386 = vmatpush2.msra.mxu0 %v457
        %1387 = vmatprep.subr.mxu0 %v452
        %1388 = vmatpush2.msra.mxu0 %v451
        %1389 = vmatprep.subr.mxu0 %v446
        %1390 = vmatpush2.msra.mxu0 %v445
        %1391 = vmatprep.subr.mxu0 %v440
        %1392 = vmatpush2.msra.mxu0 %v439
        %1393 = vmatprep.subr.mxu0 %v434
        %1394 = vmatpush2.msra.mxu0 %v433
        %1395 = vmatprep.subr.mxu0 %v428
        %1396 = vmatpush2.msra.mxu0 %v427
        %1397 = vmatprep.subr.mxu0 %v422
        %1398 = vmatpush2.msra.mxu0 %v421
        %1399 = vmatprep.subr.mxu0 %v416
        %1400 = vmatpush2.msra.mxu0 %v415
        %1401 = vmatprep.subr.mxu0 %v410
        %1402 = vmatpush2.msra.mxu0 %v409
        %1403 = vmatprep.subr.mxu0 %v404
        %1404 = vmatpush2.msra.mxu0 %v403
        %1405 = vmatprep.subr.mxu0 %v398
        %1406 = vmatpush2.msra.mxu0 %v397
        %1407 = vmatprep.subr.mxu0 %v392
        %1408 = vmatpush2.msra.mxu0 %v391
        %1409 = vmatprep.subr.mxu0 %v386
        %1410 = vmatpush2.msra.mxu0 %v385
        %1411 = vmatprep.subr.mxu0 %v380
        %1412 = vmatpush2.msra.mxu0 %v379
        %1413 = vmatprep.mubr.f32.mxu0 %v268
        %1414 = vmatmul.mubr.f32.gmra.mxu0 %v267
        %v1415 = vpop.f32.mrf.mxu0
        %v1416 = vadd.f32 %v876, %v1415
        %v1417 = vpop.f32.mrf.mxu0
        %v1418 = vadd.f32 %v880, %v1417
        %1419 = vmatprep.mubr.f32.mxu0 %v274
        %1420 = vmatmul.mubr.f32.gmra.mxu0 %v273
        %v1421 = vpop.f32.mrf.mxu0
        %v1422 = vadd.f32 %v876, %v1421
        %v1423 = vpop.f32.mrf.mxu0
        %v1424 = vadd.f32 %v880, %v1423
        %1425 = vdwg.mxu0
        %1426 = vmatprep.subr.mxu0 %v566
        %1427 = vmatpush1.msra.mxu0 %v565
        %1428 = vmatprep.subr.mxu0 %v560
        %1429 = vmatpush1.msra.mxu0 %v559
        %1430 = vmatprep.subr.mxu0 %v554
        %1431 = vmatpush1.msra.mxu0 %v553
        %1432 = vmatprep.subr.mxu0 %v548
        %1433 = vmatpush1.msra.mxu0 %v547
        %1434 = vmatprep.subr.mxu0 %v542
        %1435 = vmatpush1.msra.mxu0 %v541
        %1436 = vmatprep.subr.mxu0 %v536
        %1437 = vmatpush1.msra.mxu0 %v535
        %1438 = vmatprep.subr.mxu0 %v530
        %1439 = vmatpush1.msra.mxu0 %v529
        %1440 = vmatprep.subr.mxu0 %v524
        %1441 = vmatpush1.msra.mxu0 %v523
        %1442 = vmatprep.subr.mxu0 %v518
        %1443 = vmatpush1.msra.mxu0 %v517
        %1444 = vmatprep.subr.mxu0 %v512
        %1445 = vmatpush1.msra.mxu0 %v511
        %1446 = vmatprep.subr.mxu0 %v506
        %1447 = vmatpush1.msra.mxu0 %v505
        %1448 = vmatprep.subr.mxu0 %v500
        %1449 = vmatpush1.msra.mxu0 %v499
        %1450 = vmatprep.subr.mxu0 %v494
        %1451 = vmatpush1.msra.mxu0 %v493
        %1452 = vmatprep.subr.mxu0 %v488
        %1453 = vmatpush1.msra.mxu0 %v487
        %1454 = vmatprep.subr.mxu0 %v482
        %1455 = vmatpush1.msra.mxu0 %v481
        %1456 = vmatprep.subr.mxu0 %v476
        %1457 = vmatpush1.msra.mxu0 %v475
        %1458 = vmatprep.subr.mxu0 %v662
        %1459 = vmatpush2.msra.mxu0 %v661
        %1460 = vmatprep.subr.mxu0 %v656
        %1461 = vmatpush2.msra.mxu0 %v655
        %1462 = vmatprep.subr.mxu0 %v650
        %1463 = vmatpush2.msra.mxu0 %v649
        %1464 = vmatprep.subr.mxu0 %v644
        %1465 = vmatpush2.msra.mxu0 %v643
        %1466 = vmatprep.subr.mxu0 %v638
        %1467 = vmatpush2.msra.mxu0 %v637
        %1468 = vmatprep.subr.mxu0 %v632
        %1469 = vmatpush2.msra.mxu0 %v631
        %1470 = vmatprep.subr.mxu0 %v626
        %1471 = vmatpush2.msra.mxu0 %v625
        %1472 = vmatprep.subr.mxu0 %v620
        %1473 = vmatpush2.msra.mxu0 %v619
        %1474 = vmatprep.subr.mxu0 %v614
        %1475 = vmatpush2.msra.mxu0 %v613
        %1476 = vmatprep.subr.mxu0 %v608
        %1477 = vmatpush2.msra.mxu0 %v607
        %1478 = vmatprep.subr.mxu0 %v602
        %1479 = vmatpush2.msra.mxu0 %v601
        %1480 = vmatprep.subr.mxu0 %v596
        %1481 = vmatpush2.msra.mxu0 %v595
        %1482 = vmatprep.subr.mxu0 %v590
        %1483 = vmatpush2.msra.mxu0 %v589
        %1484 = vmatprep.subr.mxu0 %v584
        %1485 = vmatpush2.msra.mxu0 %v583
        %1486 = vmatprep.subr.mxu0 %v578
        %1487 = vmatpush2.msra.mxu0 %v577
        %1488 = vmatprep.subr.mxu0 %v572
        %1489 = vmatpush2.msra.mxu0 %v571
        %1490 = vmatprep.mubr.f32.mxu0 %v270
        %1491 = vmatmul.mubr.f32.gmra.mxu0 %v269
        %v1492 = vpop.f32.mrf.mxu0
        %v1493 = vadd.f32 %v1416, %v1492
        %v1494 = vpop.f32.mrf.mxu0
        %v1495 = vadd.f32 %v1418, %v1494
        %1496 = vmatprep.mubr.f32.mxu0 %v276
        %1497 = vmatmul.mubr.f32.gmra.mxu0 %v275
        %v1498 = vpop.f32.mrf.mxu0
        %v1499 = vadd.f32 %v1422, %v1498
        %v1500 = vpop.f32.mrf.mxu0
        %v1501 = vadd.f32 %v1424, %v1500
        %1502 = vdwg.mxu0
        %1503 = vmatprep.subr.mxu0 %v758
        %1504 = vmatpush1.msra.mxu0 %v757
        %1505 = vmatprep.subr.mxu0 %v752
        %1506 = vmatpush1.msra.mxu0 %v751
        %1507 = vmatprep.subr.mxu0 %v746
        %1508 = vmatpush1.msra.mxu0 %v745
        %1509 = vmatprep.subr.mxu0 %v740
        %1510 = vmatpush1.msra.mxu0 %v739
        %1511 = vmatprep.subr.mxu0 %v734
        %1512 = vmatpush1.msra.mxu0 %v733
        %1513 = vmatprep.subr.mxu0 %v728
        %1514 = vmatpush1.msra.mxu0 %v727
        %1515 = vmatprep.subr.mxu0 %v722
        %1516 = vmatpush1.msra.mxu0 %v721
        %1517 = vmatprep.subr.mxu0 %v716
        %1518 = vmatpush1.msra.mxu0 %v715
        %1519 = vmatprep.subr.mxu0 %v710
        %1520 = vmatpush1.msra.mxu0 %v709
        %1521 = vmatprep.subr.mxu0 %v704
        %1522 = vmatpush1.msra.mxu0 %v703
        %1523 = vmatprep.subr.mxu0 %v698
        %1524 = vmatpush1.msra.mxu0 %v697
        %1525 = vmatprep.subr.mxu0 %v692
        %1526 = vmatpush1.msra.mxu0 %v691
        %1527 = vmatprep.subr.mxu0 %v686
        %1528 = vmatpush1.msra.mxu0 %v685
        %1529 = vmatprep.subr.mxu0 %v680
        %1530 = vmatpush1.msra.mxu0 %v679
        %1531 = vmatprep.subr.mxu0 %v674
        %1532 = vmatpush1.msra.mxu0 %v673
        %1533 = vmatprep.subr.mxu0 %v668
        %1534 = vmatpush1.msra.mxu0 %v667
        %1535 = vmatprep.subr.mxu0 %v854
        %1536 = vmatpush2.msra.mxu0 %v853
        %1537 = vmatprep.subr.mxu0 %v848
        %1538 = vmatpush2.msra.mxu0 %v847
        %1539 = vmatprep.subr.mxu0 %v842
        %1540 = vmatpush2.msra.mxu0 %v841
        %1541 = vmatprep.subr.mxu0 %v836
        %1542 = vmatpush2.msra.mxu0 %v835
        %1543 = vmatprep.subr.mxu0 %v830
        %1544 = vmatpush2.msra.mxu0 %v829
        %1545 = vmatprep.subr.mxu0 %v824
        %1546 = vmatpush2.msra.mxu0 %v823
        %1547 = vmatprep.subr.mxu0 %v818
        %1548 = vmatpush2.msra.mxu0 %v817
        %1549 = vmatprep.subr.mxu0 %v812
        %1550 = vmatpush2.msra.mxu0 %v811
        %1551 = vmatprep.subr.mxu0 %v806
        %1552 = vmatpush2.msra.mxu0 %v805
        %1553 = vmatprep.subr.mxu0 %v800
        %1554 = vmatpush2.msra.mxu0 %v799
        %1555 = vmatprep.subr.mxu0 %v794
        %1556 = vmatpush2.msra.mxu0 %v793
        %1557 = vmatprep.subr.mxu0 %v788
        %1558 = vmatpush2.msra.mxu0 %v787
        %1559 = vmatprep.subr.mxu0 %v782
        %1560 = vmatpush2.msra.mxu0 %v781
        %1561 = vmatprep.subr.mxu0 %v776
        %1562 = vmatpush2.msra.mxu0 %v775
        %1563 = vmatprep.subr.mxu0 %v770
        %1564 = vmatpush2.msra.mxu0 %v769
        %1565 = vmatprep.subr.mxu0 %v764
        %1566 = vmatpush2.msra.mxu0 %v763
        %1567 = vmatprep.mubr.f32.mxu0 %v272
        %1568 = vmatmul.mubr.f32.gmra.mxu0 %v271
        %v1569 = vpop.f32.mrf.mxu0
        %v1570 = vadd.f32 %v1493, %v1569
        %v1571 = vpop.f32.mrf.mxu0
        %v1572 = vadd.f32 %v1495, %v1571
        %1573 = vmatprep.mubr.f32.mxu0 %v278
        %1574 = vmatmul.mubr.f32.gmra.mxu0 %v277
        %v1575 = vpop.f32.mrf.mxu0
        %v1576 = vadd.f32 %v1499, %v1575
        %v1577 = vpop.f32.mrf.mxu0
        %v1578 = vadd.f32 %v1501, %v1577
        %1579 = vdwg.mxu0
        %1580 = vst [vmem:[%s261] sm:$0xff] %v1108
        %1581 = vst [vmem:[%s261 + $0x8] sm:$0xff] %v1110
        %1582 = vst [vmem:[%s261 + $0x10] sm:$0xff] %v1339
        %1583 = vst [vmem:[%s261 + $0x18] sm:$0xff] %v1341
        %1584 = vst [vmem:[%s261 + $0x20] sm:$0xff] %v1570
        %1585 = vst [vmem:[%s261 + $0x28] sm:$0xff] %v1572
        %1586 = vst [vmem:[%s261 + $0x30] sm:$0xff] %v1114
        %1587 = vst [vmem:[%s261 + $0x38] sm:$0xff] %v1116
        %1588 = vst [vmem:[%s261 + $0x40] sm:$0xff] %v1345
        %1589 = vst [vmem:[%s261 + $0x48] sm:$0xff] %v1347
        %1590 = vst [vmem:[%s261 + $0x50] sm:$0xff] %v1576
        %1591 = vst [vmem:[%s261 + $0x58] sm:$0xff] %v1578
        %s1592 = sand.u32 %s121, 1
        %s1593 = scalar_lea.sflag [#allocation4], %s1592
        %s1594 = sand.u32 %s121, 1
        %s1595 = smul.addr %s1594, 96
        %s1596 = scalar_lea.vmem [#allocation8], %s1595
        // Predicated region
        $region45: #{tpu_custom_call.1} parent=31 // pred_check
          %p1597 = pneg %p131
        $region46: #{tpu_custom_call.1} parent=31 // pred_check_branch
          %1599 = sbr.rel (%p1597) target = $region48
        $region47: #{tpu_custom_call.1} parent=31 // pred_region
          %s1600 = smul.u32 2, %s25
          %s1601 = smul.u32 6, %s26
          %s1603 = ssub.s32 1536, 1536
          %1604 = vsyncadd %s1593, %s1603
          %s1605 = smul.addr %s1600, 18
          %s1606 = sadd.s32 %s1601, %s1605
          %s1607 = smul.addr %s1606, 128
          %s1608 = scalar_lea.hbm %s3, %s1607
          %s1609 = sshll.u32 %s1596, 4
          %s1610 = int_to_ptr.vmem [resolvable:$true] %s1609
          %1615 = dma.vmem_to_hbm [thread:$0]  %s1610, 1536, %s1608, %s1593, 768, 2304, 48
        $region48: #{tpu_custom_call.1} parent=31 // pred_fallthru
          _
      $region32: #{tpu_custom_call.1} parent=5 // pred_fallthru
        _
      %p1616 = scmp.le.s32.totalorder 2, %s16
      // Predicated region
      $region49: #{tpu_custom_call.1} parent=5 // pred_check
        %p1617 = pneg %p1616
      $region50: #{tpu_custom_call.1} parent=5 // pred_check_branch
        %1619 = sbr.rel (%p1617) target = $region52
      $region51: #{tpu_custom_call.1} parent=5 // pred_region
        %s1620 = ssub.s32 %s16, 2
        // Predicated region
        $region53: #{tpu_custom_call.1} parent=51 // pred_check
          %p1621 = pneg %p137
        $region54: #{tpu_custom_call.1} parent=51 // pred_check_branch
          %1623 = sbr.rel (%p1621) target = $region56
        $region55: #{tpu_custom_call.1} parent=51 // pred_region
          %s1624 = sand.u32 %s122, 1
          %s1625 = scalar_lea.sflag [#allocation4], %s1624
          %s1626 = sand.u32 %s122, 1
          %s1627 = smul.addr %s1626, 96
          %s1628 = scalar_lea.vmem [#allocation8], %s1627
          %1629 = dma.done %s1625, 1536
        $region56: #{tpu_custom_call.1} parent=51 // pred_fallthru
          _
      $region52: #{tpu_custom_call.1} parent=5 // pred_fallthru
        _
    $region6: #{tpu_custom_call.1} parent=1 // loop_footer
      %s20 = sadd.s32 1, %s16
    $region7: #{tpu_custom_call.1} parent=1 // loop_footer_branch
      %15 = sbr.rel target = $region3
    $region8: #{tpu_custom_call.1} parent=1 // loop_exit
      _
    %1630 = vsyncpa [#allocation3], 1
    %s1631 = scalar_lea.sflag [#allocation3], 1
    %1632 = vsyncpa %s1631, 1
    %1633 = vsyncpa [#allocation6], 1
    %s1634 = scalar_lea.sflag [#allocation6], 1
    %1635 = vsyncpa %s1634, 1
    %1636 = vsyncpa [#allocation4], 1
    %s1637 = scalar_lea.sflag [#allocation4], 1
    %1638 = vsyncpa %s1637, 1

</llo_original>
